<compile_context>
chip_gen: v7x
topology: tpu7x:2x2x1
jax: 0.10.0
libtpu: 0.0.40
codegen_flags: <defaults>
</compile_context>

<pallas_src>
import jax
import jax.numpy as jnp
from jax.experimental import pallas as pl
from jax.experimental.pallas import tpu as pltpu

LANE = 128   # lane width: second-layer outputs padded to a multiple of this
B_BLK = 8    # batch rows per grid step (multiple of 8 sublanes)
# TODO(synk): for very large B, raise B_BLK and double-buffer the per-row DMAs
# across grid steps; at small B the kernel is weight-DMA-bound regardless.


# --------------------------------------------------------------------------
# Fused kernel: DMA row-gather (cls + prompt) and both 2-layer MLP heads
# --------------------------------------------------------------------------
def _head(x_bf16, w1, b1, w2, b2):
    """Linear -> ReLU -> Linear.  x: [B_blk, D] bf16 -> [B_blk, N_pad] f32."""
    h = jnp.dot(x_bf16, w1, preferred_element_type=jnp.float32) + b1
    h = jnp.maximum(h, 0.0)          # bias-add / ReLU in f32 (v5e-safe)
    y = jnp.dot(h.astype(w2.dtype), w2, preferred_element_type=jnp.float32) + b2
    return y


def fused_heads_kernel(rows_idx_ref,            # SMEM [2*B_pad] int32 (prefetch)
                       text_ref,                # HBM  [B*S, D] f32 (pl.ANY)
                       w1_ref, b1_ref, w2_ref, b2_ref,
                       pw1_ref, pb1_ref, pw2_ref, pb2_ref,
                       y_ref, yp_ref,           # VMEM [B_BLK, C_pad] / [B_BLK, P_pad]
                       rows_ref, sems):         # VMEM [2*B_BLK, D] f32, DMA sems
    b_blk = y_ref.shape[0]
    base = pl.program_id(0) * b_blk

    # Gather exactly the 2 rows per batch element that the heads consume.
    # Flat row indices were precomputed in the wrapper and live in SMEM, so
    # this is pure scalar addressing + DMA work — no [B,S] iota/compare and
    # no full-text load.
    copies = []
    for i in range(b_blk):
        gb = base + i
        cls_copy = pltpu.make_async_copy(
            text_ref.at[pl.ds(rows_idx_ref[2 * gb], 1), :],
            rows_ref.at[pl.ds(i, 1), :],
            sems.at[i])
        prm_copy = pltpu.make_async_copy(
            text_ref.at[pl.ds(rows_idx_ref[2 * gb + 1], 1), :],
            rows_ref.at[pl.ds(b_blk + i, 1), :],
            sems.at[b_blk + i])
        cls_copy.start()
        prm_copy.start()
        copies.append(cls_copy)
        copies.append(prm_copy)
    for c in copies:
        c.wait()

    rows = rows_ref[...]                                   # [2*B_blk, D] f32
    cls_x = rows[:b_blk].astype(jnp.bfloat16)              # [B_blk, D]
    prompt_x = rows[b_blk:].astype(jnp.bfloat16)           # [B_blk, D]

    y_ref[...] = _head(cls_x, w1_ref[...], b1_ref[...],
                       w2_ref[...], b2_ref[...]).astype(y_ref.dtype)
    yp_ref[...] = _head(prompt_x, pw1_ref[...], pb1_ref[...],
                        pw2_ref[...], pb2_ref[...]).astype(yp_ref.dtype)


def fused_heads(text_vec, mask_idx,
                w1, b1, w2, b2, pw1, pb1, pw2, pb2, class_num):
    """text_vec: [B, S, D] f32 (encoder output), mask_idx: [B] int."""
    B, S, D = text_vec.shape
    H1, C = w2.shape        # 1024, class_num
    H2, P = pw2.shape       # 256, 2

    C_pad = pl.cdiv(C, LANE) * LANE
    P_pad = pl.cdiv(P, LANE) * LANE
    B_pad = pl.cdiv(B, B_BLK) * B_BLK
    n_blk = B_pad // B_BLK

    # bf16 matmul operands (halves weight DMA); lane-padded second layer.
    w1_b = w1.astype(jnp.bfloat16)
    pw1_b = pw1.astype(jnp.bfloat16)
    w2_p = jnp.pad(w2, ((0, 0), (0, C_pad - C))).astype(jnp.bfloat16)
    b2_p = jnp.pad(b2, (0, C_pad - C)).reshape(1, C_pad).astype(jnp.float32)
    pw2_p = jnp.pad(pw2, ((0, 0), (0, P_pad - P))).astype(jnp.bfloat16)
    pb2_p = jnp.pad(pb2, (0, P_pad - P)).reshape(1, P_pad).astype(jnp.float32)
    b1_r = b1.reshape(1, -1).astype(jnp.float32)
    pb1_r = pb1.reshape(1, -1).astype(jnp.float32)

    # Flat row indices into the [B*S, D] view of text: (cls, prompt) per batch
    # element, interleaved.  Clamped — manual DMAs have no bounds check.
    # Padding batch entries point at row 0 (valid, result sliced off).
    idx = jnp.clip(mask_idx.astype(jnp.int32), 0, S - 1)
    cls_rows = jnp.arange(B, dtype=jnp.int32) * S
    flat_rows = jnp.stack([cls_rows, cls_rows + idx], axis=1).reshape(-1)
    flat_rows = jnp.pad(flat_rows, (0, 2 * (B_pad - B)))

    text2d = text_vec.reshape(B * S, D)     # contiguous, no-copy reshape

    const = lambda b, idx_ref: (0, 0)       # weights VMEM-resident across grid
    grid_spec = pltpu.PrefetchScalarGridSpec(
        num_scalar_prefetch=1,
        grid=(n_blk,),
        in_specs=[
            pl.BlockSpec(memory_space=pl.ANY),       # text stays in HBM
            pl.BlockSpec(w1_b.shape, const),
            pl.BlockSpec(b1_r.shape, const),
            pl.BlockSpec(w2_p.shape, const),
            pl.BlockSpec(b2_p.shape, const),
            pl.BlockSpec(pw1_b.shape, const),
            pl.BlockSpec(pb1_r.shape, const),
            pl.BlockSpec(pw2_p.shape, const),
            pl.BlockSpec(pb2_p.shape, const),
        ],
        out_specs=(
            pl.BlockSpec((B_BLK, C_pad), lambda b, idx_ref: (b, 0)),
            pl.BlockSpec((B_BLK, P_pad), lambda b, idx_ref: (b, 0)),
        ),
        scratch_shapes=[
            pltpu.VMEM((2 * B_BLK, D), jnp.float32),
            pltpu.SemaphoreType.DMA((2 * B_BLK,)),
        ],
    )

    # VMEM budget from actual buffer math (x2 for double buffering) + slack;
    # stays well under v7x's 64 MiB ceiling.
    weight_bytes = (w1_b.size * 2 + b1_r.size * 4 + w2_p.size * 2 + b2_p.size * 4
                    + pw1_b.size * 2 + pb1_r.size * 4 + pw2_p.size * 2
                    + pb2_p.size * 4)
    out_block_bytes = B_BLK * (C_pad + P_pad) * 4
    scratch_bytes = 2 * B_BLK * D * 4
    vmem_need = 2 * (weight_bytes + out_block_bytes) + scratch_bytes
    vmem_limit = int(min(48 * 1024 * 1024, max(vmem_need + (4 << 20), 8 << 20)))

    flops = 2 * B_pad * (D * H1 + H1 * C_pad + D * H2 + H2 * P_pad)
    bytes_accessed = (2 * B_pad * D * 4              # gathered text rows only
                      + flat_rows.size * 4
                      + weight_bytes
                      + B_pad * (C_pad + P_pad) * 4)
    cost = pl.CostEstimate(flops=flops, transcendentals=0,
                           bytes_accessed=bytes_accessed)

    y_pad, yp_pad = pl.pallas_call(
        fused_heads_kernel,
        out_shape=(jax.ShapeDtypeStruct((B_pad, C_pad), jnp.float32),
                   jax.ShapeDtypeStruct((B_pad, P_pad), jnp.float32)),
        grid_spec=grid_spec,
        compiler_params=pltpu.CompilerParams(
            dimension_semantics=("parallel",),
            vmem_limit_bytes=vmem_limit),
        cost_estimate=cost,
    )(flat_rows, text2d,
      w1_b, b1_r, w2_p, b2_p,
      pw1_b, pb1_r, pw2_p, pb2_p)

    return y_pad[:B, :C], yp_pad[:B, :P]


# --------------------------------------------------------------------------
# Synthetic PLM token encoder (stands in for PLMTokenEncoder).
# TODO(synk): the real PLMTokenEncoder is a pretrained transformer LM; here it
# is replaced by a deterministic embedding lookup with attention-mask zeroing.
# --------------------------------------------------------------------------
def plm_token_encoder(sentence, mask, emb_table):
    # sentence: [B, S] int32, mask: [B, S] float32, emb_table: [V, D] f32
    tok = emb_table[sentence]                # [B, S, D]
    return tok * mask[..., None]             # zero padded positions


# --------------------------------------------------------------------------
# Parameter initialization (deterministic, mirrors the module's __init__)
# --------------------------------------------------------------------------
def xavier_normal(key, fan_in, fan_out):
    std = (2.0 / (fan_in + fan_out)) ** 0.5
    return std * jax.random.normal(key, (fan_in, fan_out), dtype=jnp.float32)


def init_params(key, vocab_size, embedding_dim, class_num):
    ks = jax.random.split(key, 9)
    return {
        "emb": 0.02 * jax.random.normal(ks[0], (vocab_size, embedding_dim),
                                        dtype=jnp.float32),
        # cls head: D -> 1024 -> class_num
        "w1": xavier_normal(ks[1], embedding_dim, 1024),
        "b1": 0.01 * jax.random.normal(ks[2], (1024,), dtype=jnp.float32),
        "w2": xavier_normal(ks[3], 1024, class_num),
        "b2": 0.01 * jax.random.normal(ks[4], (class_num,), dtype=jnp.float32),
        # prompt head: D -> 256 -> 2
        "pw1": xavier_normal(ks[5], embedding_dim, 256),
        "pb1": 0.01 * jax.random.normal(ks[6], (256,), dtype=jnp.float32),
        "pw2": xavier_normal(ks[7], 256, 2),
        "pb2": 0.01 * jax.random.normal(ks[8], (2,), dtype=jnp.float32),
    }


# --------------------------------------------------------------------------
# Full forward pass (equivalent of Model.forward)
# --------------------------------------------------------------------------
def model_forward(params, sentence, mask, mask_idx, class_num):
    text_vec = plm_token_encoder(sentence, mask, params["emb"])   # [B,S,D] f32
    return fused_heads(
        text_vec, mask_idx,
        params["w1"], params["b1"], params["w2"], params["b2"],
        params["pw1"], params["pb1"], params["pw2"], params["pb2"],
        class_num)


def reference_forward(params, sentence, mask, mask_idx, class_num):
    """Pure-JAX reference mirroring the PyTorch module (f32 throughout)."""
    tv = plm_token_encoder(sentence, mask, params["emb"])
    b = jnp.arange(sentence.shape[0])
    cls_v = tv[b, 0]
    prm_v = tv[b, jnp.clip(mask_idx, 0, sentence.shape[1] - 1)]
    h = jnp.maximum(cls_v @ params["w1"] + params["b1"], 0.0)
    y = h @ params["w2"] + params["b2"]
    ph = jnp.maximum(prm_v @ params["pw1"] + params["pb1"], 0.0)
    yp = ph @ params["pw2"] + params["pb2"]
    return y, yp


if __name__ == "__main__":
    # Small, forward-consistent shapes.
    B, S, D = 2, 8, 32
    VOCAB = 100
    CLASS_NUM = 4

    key = jax.random.PRNGKey(0)
    k_param, k_sent, k_idx = jax.random.split(key, 3)

    params = init_params(k_param, VOCAB, D, CLASS_NUM)

    sentence = jax.random.randint(k_sent, (B, S), 0, VOCAB, dtype=jnp.int32)
    mask = jnp.ones((B, S), dtype=jnp.float32)
    mask_idx = jax.random.randint(k_idx, (B,), 1, S, dtype=jnp.int32)

    y_hat, y_hat_prompt = model_forward(params, sentence, mask, mask_idx,
                                        CLASS_NUM)
    jax.block_until_ready((y_hat, y_hat_prompt))

    assert y_hat.shape == (B, CLASS_NUM)
    assert y_hat_prompt.shape == (B, 2)
    assert bool(jnp.all(jnp.isfinite(y_hat)))
    assert bool(jnp.all(jnp.isfinite(y_hat_prompt)))

    # Correctness check against the pure-JAX reference (bf16-matmul tolerance).
    y_ref, yp_ref = reference_forward(params, sentence, mask, mask_idx,
                                      CLASS_NUM)
    assert float(jnp.max(jnp.abs(y_hat - y_ref))) < 5e-2
    assert float(jnp.max(jnp.abs(y_hat_prompt - yp_ref))) < 5e-2

    print("KERNEL_OK")
</pallas_src>

<mosaic_0001>
module attributes {stable_mosaic.version = 11 : i64} {
  func.func @fused_heads_kernel(%arg0: i32, %arg1: memref<16xi32, #tpu.memory_space<smem>>, %arg2: memref<16x32xf32, #tpu.memory_space<any>>, %arg3: memref<32x1024xbf16, #tpu.memory_space<vmem>>, %arg4: memref<1x1024xf32, #tpu.memory_space<vmem>>, %arg5: memref<1024x128xbf16, #tpu.memory_space<vmem>>, %arg6: memref<1x128xf32, #tpu.memory_space<vmem>>, %arg7: memref<32x256xbf16, #tpu.memory_space<vmem>>, %arg8: memref<1x256xf32, #tpu.memory_space<vmem>>, %arg9: memref<256x128xbf16, #tpu.memory_space<vmem>>, %arg10: memref<1x128xf32, #tpu.memory_space<vmem>>, %arg11: memref<8x128xf32, #tpu.memory_space<vmem>>, %arg12: memref<8x128xf32, #tpu.memory_space<vmem>>, %arg13: memref<16x32xf32, #tpu.memory_space<vmem>>, %arg14: memref<16x!tpu.dma_semaphore, #tpu.memory_space<semaphore_mem>>) attributes {dimension_semantics = [#tpu.dimension_semantics<parallel>], iteration_bounds = array<i64: 1>, scalar_prefetch = 1 : i64, scratch_operands = 2 : i64, tpu.core_type = #tpu.core_type<tc>, window_params = [{}, {pipeline_mode = #tpu.pipeline_mode<synchronous>, transform_indices = @transform_1, window_bounds = array<i64: 32, 1024>}, {pipeline_mode = #tpu.pipeline_mode<synchronous>, transform_indices = @transform_2, window_bounds = array<i64: 1, 1024>}, {pipeline_mode = #tpu.pipeline_mode<synchronous>, transform_indices = @transform_3, window_bounds = array<i64: 1024, 128>}, {pipeline_mode = #tpu.pipeline_mode<synchronous>, transform_indices = @transform_4, window_bounds = array<i64: 1, 128>}, {pipeline_mode = #tpu.pipeline_mode<synchronous>, transform_indices = @transform_5, window_bounds = array<i64: 32, 256>}, {pipeline_mode = #tpu.pipeline_mode<synchronous>, transform_indices = @transform_6, window_bounds = array<i64: 1, 256>}, {pipeline_mode = #tpu.pipeline_mode<synchronous>, transform_indices = @transform_7, window_bounds = array<i64: 256, 128>}, {pipeline_mode = #tpu.pipeline_mode<synchronous>, transform_indices = @transform_8, window_bounds = array<i64: 1, 128>}, {transform_indices = @transform_9, window_bounds = array<i64: 8, 128>}, {transform_indices = @transform_10, window_bounds = array<i64: 8, 128>}]} {
    %c8_i32 = arith.constant 8 : i32
    %0 = arith.muli %arg0, %c8_i32 : i32
    %c0_i32 = arith.constant 0 : i32
    %1 = arith.addi %0, %c0_i32 : i32
    %c2_i32 = arith.constant 2 : i32
    %2 = arith.muli %c2_i32, %1 : i32
    %3 = arith.index_cast %2 : i32 to index
    %4 = memref.load %arg1[%3] : memref<16xi32, #tpu.memory_space<smem>>
    %c2_i32_0 = arith.constant 2 : i32
    %5 = arith.muli %c2_i32_0, %1 : i32
    %c1_i32 = arith.constant 1 : i32
    %6 = arith.addi %5, %c1_i32 : i32
    %7 = arith.index_cast %6 : i32 to index
    %8 = memref.load %arg1[%7] : memref<16xi32, #tpu.memory_space<smem>>
    %c0_i32_1 = arith.constant 0 : i32
    %c0_i32_2 = arith.constant 0 : i32
    %9 = tpu.memref_slice %arg2[%4, %c0_i32_2] : memref<16x32xf32, #tpu.memory_space<any>> -> memref<1x32xf32, #tpu.memory_space<any>>
    %c0_i32_3 = arith.constant 0 : i32
    %c0_i32_4 = arith.constant 0 : i32
    %10 = tpu.memref_slice %arg13[%c0_i32_3, %c0_i32_4] : memref<16x32xf32, #tpu.memory_space<vmem>> -> memref<1x32xf32, #tpu.memory_space<vmem>>
    %11 = tpu.memref_slice %arg14[%c0_i32_1] : memref<16x!tpu.dma_semaphore, #tpu.memory_space<semaphore_mem>> -> memref<1x!tpu.dma_semaphore, #tpu.memory_space<semaphore_mem>>
    %12 = tpu.memref_squeeze %11 : memref<1x!tpu.dma_semaphore, #tpu.memory_space<semaphore_mem>> -> memref<!tpu.dma_semaphore, #tpu.memory_space<semaphore_mem>>
    tpu.enqueue_dma source(%9 : memref<1x32xf32, #tpu.memory_space<any>>) target(%10 : memref<1x32xf32, #tpu.memory_space<vmem>>) target_semaphore(%12 : memref<!tpu.dma_semaphore, #tpu.memory_space<semaphore_mem>>)
    %c8_i32_5 = arith.constant 8 : i32
    %c0_i32_6 = arith.constant 0 : i32
    %13 = tpu.memref_slice %arg2[%8, %c0_i32_6] : memref<16x32xf32, #tpu.memory_space<any>> -> memref<1x32xf32, #tpu.memory_space<any>>
    %c8_i32_7 = arith.constant 8 : i32
    %c0_i32_8 = arith.constant 0 : i32
    %14 = tpu.memref_slice %arg13[%c8_i32_7, %c0_i32_8] : memref<16x32xf32, #tpu.memory_space<vmem>> -> memref<1x32xf32, #tpu.memory_space<vmem>>
    %15 = tpu.memref_slice %arg14[%c8_i32_5] : memref<16x!tpu.dma_semaphore, #tpu.memory_space<semaphore_mem>> -> memref<1x!tpu.dma_semaphore, #tpu.memory_space<semaphore_mem>>
    %16 = tpu.memref_squeeze %15 : memref<1x!tpu.dma_semaphore, #tpu.memory_space<semaphore_mem>> -> memref<!tpu.dma_semaphore, #tpu.memory_space<semaphore_mem>>
    tpu.enqueue_dma source(%13 : memref<1x32xf32, #tpu.memory_space<any>>) target(%14 : memref<1x32xf32, #tpu.memory_space<vmem>>) target_semaphore(%16 : memref<!tpu.dma_semaphore, #tpu.memory_space<semaphore_mem>>)
    %c1_i32_9 = arith.constant 1 : i32
    %17 = arith.addi %0, %c1_i32_9 : i32
    %c2_i32_10 = arith.constant 2 : i32
    %18 = arith.muli %c2_i32_10, %17 : i32
    %19 = arith.index_cast %18 : i32 to index
    %20 = memref.load %arg1[%19] : memref<16xi32, #tpu.memory_space<smem>>
    %c2_i32_11 = arith.constant 2 : i32
    %21 = arith.muli %c2_i32_11, %17 : i32
    %c1_i32_12 = arith.constant 1 : i32
    %22 = arith.addi %21, %c1_i32_12 : i32
    %23 = arith.index_cast %22 : i32 to index
    %24 = memref.load %arg1[%23] : memref<16xi32, #tpu.memory_space<smem>>
    %c1_i32_13 = arith.constant 1 : i32
    %c0_i32_14 = arith.constant 0 : i32
    %25 = tpu.memref_slice %arg2[%20, %c0_i32_14] : memref<16x32xf32, #tpu.memory_space<any>> -> memref<1x32xf32, #tpu.memory_space<any>>
    %c1_i32_15 = arith.constant 1 : i32
    %c0_i32_16 = arith.constant 0 : i32
    %26 = tpu.memref_slice %arg13[%c1_i32_15, %c0_i32_16] : memref<16x32xf32, #tpu.memory_space<vmem>> -> memref<1x32xf32, #tpu.memory_space<vmem>>
    %27 = tpu.memref_slice %arg14[%c1_i32_13] : memref<16x!tpu.dma_semaphore, #tpu.memory_space<semaphore_mem>> -> memref<1x!tpu.dma_semaphore, #tpu.memory_space<semaphore_mem>>
    %28 = tpu.memref_squeeze %27 : memref<1x!tpu.dma_semaphore, #tpu.memory_space<semaphore_mem>> -> memref<!tpu.dma_semaphore, #tpu.memory_space<semaphore_mem>>
    tpu.enqueue_dma source(%25 : memref<1x32xf32, #tpu.memory_space<any>>) target(%26 : memref<1x32xf32, #tpu.memory_space<vmem>>) target_semaphore(%28 : memref<!tpu.dma_semaphore, #tpu.memory_space<semaphore_mem>>)
    %c9_i32 = arith.constant 9 : i32
    %c0_i32_17 = arith.constant 0 : i32
    %29 = tpu.memref_slice %arg2[%24, %c0_i32_17] : memref<16x32xf32, #tpu.memory_space<any>> -> memref<1x32xf32, #tpu.memory_space<any>>
    %c9_i32_18 = arith.constant 9 : i32
    %c0_i32_19 = arith.constant 0 : i32
    %30 = tpu.memref_slice %arg13[%c9_i32_18, %c0_i32_19] : memref<16x32xf32, #tpu.memory_space<vmem>> -> memref<1x32xf32, #tpu.memory_space<vmem>>
    %31 = tpu.memref_slice %arg14[%c9_i32] : memref<16x!tpu.dma_semaphore, #tpu.memory_space<semaphore_mem>> -> memref<1x!tpu.dma_semaphore, #tpu.memory_space<semaphore_mem>>
    %32 = tpu.memref_squeeze %31 : memref<1x!tpu.dma_semaphore, #tpu.memory_space<semaphore_mem>> -> memref<!tpu.dma_semaphore, #tpu.memory_space<semaphore_mem>>
    tpu.enqueue_dma source(%29 : memref<1x32xf32, #tpu.memory_space<any>>) target(%30 : memref<1x32xf32, #tpu.memory_space<vmem>>) target_semaphore(%32 : memref<!tpu.dma_semaphore, #tpu.memory_space<semaphore_mem>>)
    %c2_i32_20 = arith.constant 2 : i32
    %33 = arith.addi %0, %c2_i32_20 : i32
    %c2_i32_21 = arith.constant 2 : i32
    %34 = arith.muli %c2_i32_21, %33 : i32
    %35 = arith.index_cast %34 : i32 to index
    %36 = memref.load %arg1[%35] : memref<16xi32, #tpu.memory_space<smem>>
    %c2_i32_22 = arith.constant 2 : i32
    %37 = arith.muli %c2_i32_22, %33 : i32
    %c1_i32_23 = arith.constant 1 : i32
    %38 = arith.addi %37, %c1_i32_23 : i32
    %39 = arith.index_cast %38 : i32 to index
    %40 = memref.load %arg1[%39] : memref<16xi32, #tpu.memory_space<smem>>
    %c2_i32_24 = arith.constant 2 : i32
    %c0_i32_25 = arith.constant 0 : i32
    %41 = tpu.memref_slice %arg2[%36, %c0_i32_25] : memref<16x32xf32, #tpu.memory_space<any>> -> memref<1x32xf32, #tpu.memory_space<any>>
    %c2_i32_26 = arith.constant 2 : i32
    %c0_i32_27 = arith.constant 0 : i32
    %42 = tpu.memref_slice %arg13[%c2_i32_26, %c0_i32_27] : memref<16x32xf32, #tpu.memory_space<vmem>> -> memref<1x32xf32, #tpu.memory_space<vmem>>
    %43 = tpu.memref_slice %arg14[%c2_i32_24] : memref<16x!tpu.dma_semaphore, #tpu.memory_space<semaphore_mem>> -> memref<1x!tpu.dma_semaphore, #tpu.memory_space<semaphore_mem>>
    %44 = tpu.memref_squeeze %43 : memref<1x!tpu.dma_semaphore, #tpu.memory_space<semaphore_mem>> -> memref<!tpu.dma_semaphore, #tpu.memory_space<semaphore_mem>>
    tpu.enqueue_dma source(%41 : memref<1x32xf32, #tpu.memory_space<any>>) target(%42 : memref<1x32xf32, #tpu.memory_space<vmem>>) target_semaphore(%44 : memref<!tpu.dma_semaphore, #tpu.memory_space<semaphore_mem>>)
    %c10_i32 = arith.constant 10 : i32
    %c0_i32_28 = arith.constant 0 : i32
    %45 = tpu.memref_slice %arg2[%40, %c0_i32_28] : memref<16x32xf32, #tpu.memory_space<any>> -> memref<1x32xf32, #tpu.memory_space<any>>
    %c10_i32_29 = arith.constant 10 : i32
    %c0_i32_30 = arith.constant 0 : i32
    %46 = tpu.memref_slice %arg13[%c10_i32_29, %c0_i32_30] : memref<16x32xf32, #tpu.memory_space<vmem>> -> memref<1x32xf32, #tpu.memory_space<vmem>>
    %47 = tpu.memref_slice %arg14[%c10_i32] : memref<16x!tpu.dma_semaphore, #tpu.memory_space<semaphore_mem>> -> memref<1x!tpu.dma_semaphore, #tpu.memory_space<semaphore_mem>>
    %48 = tpu.memref_squeeze %47 : memref<1x!tpu.dma_semaphore, #tpu.memory_space<semaphore_mem>> -> memref<!tpu.dma_semaphore, #tpu.memory_space<semaphore_mem>>
    tpu.enqueue_dma source(%45 : memref<1x32xf32, #tpu.memory_space<any>>) target(%46 : memref<1x32xf32, #tpu.memory_space<vmem>>) target_semaphore(%48 : memref<!tpu.dma_semaphore, #tpu.memory_space<semaphore_mem>>)
    %c3_i32 = arith.constant 3 : i32
    %49 = arith.addi %0, %c3_i32 : i32
    %c2_i32_31 = arith.constant 2 : i32
    %50 = arith.muli %c2_i32_31, %49 : i32
    %51 = arith.index_cast %50 : i32 to index
    %52 = memref.load %arg1[%51] : memref<16xi32, #tpu.memory_space<smem>>
    %c2_i32_32 = arith.constant 2 : i32
    %53 = arith.muli %c2_i32_32, %49 : i32
    %c1_i32_33 = arith.constant 1 : i32
    %54 = arith.addi %53, %c1_i32_33 : i32
    %55 = arith.index_cast %54 : i32 to index
    %56 = memref.load %arg1[%55] : memref<16xi32, #tpu.memory_space<smem>>
    %c3_i32_34 = arith.constant 3 : i32
    %c0_i32_35 = arith.constant 0 : i32
    %57 = tpu.memref_slice %arg2[%52, %c0_i32_35] : memref<16x32xf32, #tpu.memory_space<any>> -> memref<1x32xf32, #tpu.memory_space<any>>
    %c3_i32_36 = arith.constant 3 : i32
    %c0_i32_37 = arith.constant 0 : i32
    %58 = tpu.memref_slice %arg13[%c3_i32_36, %c0_i32_37] : memref<16x32xf32, #tpu.memory_space<vmem>> -> memref<1x32xf32, #tpu.memory_space<vmem>>
    %59 = tpu.memref_slice %arg14[%c3_i32_34] : memref<16x!tpu.dma_semaphore, #tpu.memory_space<semaphore_mem>> -> memref<1x!tpu.dma_semaphore, #tpu.memory_space<semaphore_mem>>
    %60 = tpu.memref_squeeze %59 : memref<1x!tpu.dma_semaphore, #tpu.memory_space<semaphore_mem>> -> memref<!tpu.dma_semaphore, #tpu.memory_space<semaphore_mem>>
    tpu.enqueue_dma source(%57 : memref<1x32xf32, #tpu.memory_space<any>>) target(%58 : memref<1x32xf32, #tpu.memory_space<vmem>>) target_semaphore(%60 : memref<!tpu.dma_semaphore, #tpu.memory_space<semaphore_mem>>)
    %c11_i32 = arith.constant 11 : i32
    %c0_i32_38 = arith.constant 0 : i32
    %61 = tpu.memref_slice %arg2[%56, %c0_i32_38] : memref<16x32xf32, #tpu.memory_space<any>> -> memref<1x32xf32, #tpu.memory_space<any>>
    %c11_i32_39 = arith.constant 11 : i32
    %c0_i32_40 = arith.constant 0 : i32
    %62 = tpu.memref_slice %arg13[%c11_i32_39, %c0_i32_40] : memref<16x32xf32, #tpu.memory_space<vmem>> -> memref<1x32xf32, #tpu.memory_space<vmem>>
    %63 = tpu.memref_slice %arg14[%c11_i32] : memref<16x!tpu.dma_semaphore, #tpu.memory_space<semaphore_mem>> -> memref<1x!tpu.dma_semaphore, #tpu.memory_space<semaphore_mem>>
    %64 = tpu.memref_squeeze %63 : memref<1x!tpu.dma_semaphore, #tpu.memory_space<semaphore_mem>> -> memref<!tpu.dma_semaphore, #tpu.memory_space<semaphore_mem>>
    tpu.enqueue_dma source(%61 : memref<1x32xf32, #tpu.memory_space<any>>) target(%62 : memref<1x32xf32, #tpu.memory_space<vmem>>) target_semaphore(%64 : memref<!tpu.dma_semaphore, #tpu.memory_space<semaphore_mem>>)
    %c4_i32 = arith.constant 4 : i32
    %65 = arith.addi %0, %c4_i32 : i32
    %c2_i32_41 = arith.constant 2 : i32
    %66 = arith.muli %c2_i32_41, %65 : i32
    %67 = arith.index_cast %66 : i32 to index
    %68 = memref.load %arg1[%67] : memref<16xi32, #tpu.memory_space<smem>>
    %c2_i32_42 = arith.constant 2 : i32
    %69 = arith.muli %c2_i32_42, %65 : i32
    %c1_i32_43 = arith.constant 1 : i32
    %70 = arith.addi %69, %c1_i32_43 : i32
    %71 = arith.index_cast %70 : i32 to index
    %72 = memref.load %arg1[%71] : memref<16xi32, #tpu.memory_space<smem>>
    %c4_i32_44 = arith.constant 4 : i32
    %c0_i32_45 = arith.constant 0 : i32
    %73 = tpu.memref_slice %arg2[%68, %c0_i32_45] : memref<16x32xf32, #tpu.memory_space<any>> -> memref<1x32xf32, #tpu.memory_space<any>>
    %c4_i32_46 = arith.constant 4 : i32
    %c0_i32_47 = arith.constant 0 : i32
    %74 = tpu.memref_slice %arg13[%c4_i32_46, %c0_i32_47] : memref<16x32xf32, #tpu.memory_space<vmem>> -> memref<1x32xf32, #tpu.memory_space<vmem>>
    %75 = tpu.memref_slice %arg14[%c4_i32_44] : memref<16x!tpu.dma_semaphore, #tpu.memory_space<semaphore_mem>> -> memref<1x!tpu.dma_semaphore, #tpu.memory_space<semaphore_mem>>
    %76 = tpu.memref_squeeze %75 : memref<1x!tpu.dma_semaphore, #tpu.memory_space<semaphore_mem>> -> memref<!tpu.dma_semaphore, #tpu.memory_space<semaphore_mem>>
    tpu.enqueue_dma source(%73 : memref<1x32xf32, #tpu.memory_space<any>>) target(%74 : memref<1x32xf32, #tpu.memory_space<vmem>>) target_semaphore(%76 : memref<!tpu.dma_semaphore, #tpu.memory_space<semaphore_mem>>)
    %c12_i32 = arith.constant 12 : i32
    %c0_i32_48 = arith.constant 0 : i32
    %77 = tpu.memref_slice %arg2[%72, %c0_i32_48] : memref<16x32xf32, #tpu.memory_space<any>> -> memref<1x32xf32, #tpu.memory_space<any>>
    %c12_i32_49 = arith.constant 12 : i32
    %c0_i32_50 = arith.constant 0 : i32
    %78 = tpu.memref_slice %arg13[%c12_i32_49, %c0_i32_50] : memref<16x32xf32, #tpu.memory_space<vmem>> -> memref<1x32xf32, #tpu.memory_space<vmem>>
    %79 = tpu.memref_slice %arg14[%c12_i32] : memref<16x!tpu.dma_semaphore, #tpu.memory_space<semaphore_mem>> -> memref<1x!tpu.dma_semaphore, #tpu.memory_space<semaphore_mem>>
    %80 = tpu.memref_squeeze %79 : memref<1x!tpu.dma_semaphore, #tpu.memory_space<semaphore_mem>> -> memref<!tpu.dma_semaphore, #tpu.memory_space<semaphore_mem>>
    tpu.enqueue_dma source(%77 : memref<1x32xf32, #tpu.memory_space<any>>) target(%78 : memref<1x32xf32, #tpu.memory_space<vmem>>) target_semaphore(%80 : memref<!tpu.dma_semaphore, #tpu.memory_space<semaphore_mem>>)
    %c5_i32 = arith.constant 5 : i32
    %81 = arith.addi %0, %c5_i32 : i32
    %c2_i32_51 = arith.constant 2 : i32
    %82 = arith.muli %c2_i32_51, %81 : i32
    %83 = arith.index_cast %82 : i32 to index
    %84 = memref.load %arg1[%83] : memref<16xi32, #tpu.memory_space<smem>>
    %c2_i32_52 = arith.constant 2 : i32
    %85 = arith.muli %c2_i32_52, %81 : i32
    %c1_i32_53 = arith.constant 1 : i32
    %86 = arith.addi %85, %c1_i32_53 : i32
    %87 = arith.index_cast %86 : i32 to index
    %88 = memref.load %arg1[%87] : memref<16xi32, #tpu.memory_space<smem>>
    %c5_i32_54 = arith.constant 5 : i32
    %c0_i32_55 = arith.constant 0 : i32
    %89 = tpu.memref_slice %arg2[%84, %c0_i32_55] : memref<16x32xf32, #tpu.memory_space<any>> -> memref<1x32xf32, #tpu.memory_space<any>>
    %c5_i32_56 = arith.constant 5 : i32
    %c0_i32_57 = arith.constant 0 : i32
    %90 = tpu.memref_slice %arg13[%c5_i32_56, %c0_i32_57] : memref<16x32xf32, #tpu.memory_space<vmem>> -> memref<1x32xf32, #tpu.memory_space<vmem>>
    %91 = tpu.memref_slice %arg14[%c5_i32_54] : memref<16x!tpu.dma_semaphore, #tpu.memory_space<semaphore_mem>> -> memref<1x!tpu.dma_semaphore, #tpu.memory_space<semaphore_mem>>
    %92 = tpu.memref_squeeze %91 : memref<1x!tpu.dma_semaphore, #tpu.memory_space<semaphore_mem>> -> memref<!tpu.dma_semaphore, #tpu.memory_space<semaphore_mem>>
    tpu.enqueue_dma source(%89 : memref<1x32xf32, #tpu.memory_space<any>>) target(%90 : memref<1x32xf32, #tpu.memory_space<vmem>>) target_semaphore(%92 : memref<!tpu.dma_semaphore, #tpu.memory_space<semaphore_mem>>)
    %c13_i32 = arith.constant 13 : i32
    %c0_i32_58 = arith.constant 0 : i32
    %93 = tpu.memref_slice %arg2[%88, %c0_i32_58] : memref<16x32xf32, #tpu.memory_space<any>> -> memref<1x32xf32, #tpu.memory_space<any>>
    %c13_i32_59 = arith.constant 13 : i32
    %c0_i32_60 = arith.constant 0 : i32
    %94 = tpu.memref_slice %arg13[%c13_i32_59, %c0_i32_60] : memref<16x32xf32, #tpu.memory_space<vmem>> -> memref<1x32xf32, #tpu.memory_space<vmem>>
    %95 = tpu.memref_slice %arg14[%c13_i32] : memref<16x!tpu.dma_semaphore, #tpu.memory_space<semaphore_mem>> -> memref<1x!tpu.dma_semaphore, #tpu.memory_space<semaphore_mem>>
    %96 = tpu.memref_squeeze %95 : memref<1x!tpu.dma_semaphore, #tpu.memory_space<semaphore_mem>> -> memref<!tpu.dma_semaphore, #tpu.memory_space<semaphore_mem>>
    tpu.enqueue_dma source(%93 : memref<1x32xf32, #tpu.memory_space<any>>) target(%94 : memref<1x32xf32, #tpu.memory_space<vmem>>) target_semaphore(%96 : memref<!tpu.dma_semaphore, #tpu.memory_space<semaphore_mem>>)
    %c6_i32 = arith.constant 6 : i32
    %97 = arith.addi %0, %c6_i32 : i32
    %c2_i32_61 = arith.constant 2 : i32
    %98 = arith.muli %c2_i32_61, %97 : i32
    %99 = arith.index_cast %98 : i32 to index
    %100 = memref.load %arg1[%99] : memref<16xi32, #tpu.memory_space<smem>>
    %c2_i32_62 = arith.constant 2 : i32
    %101 = arith.muli %c2_i32_62, %97 : i32
    %c1_i32_63 = arith.constant 1 : i32
    %102 = arith.addi %101, %c1_i32_63 : i32
    %103 = arith.index_cast %102 : i32 to index
    %104 = memref.load %arg1[%103] : memref<16xi32, #tpu.memory_space<smem>>
    %c6_i32_64 = arith.constant 6 : i32
    %c0_i32_65 = arith.constant 0 : i32
    %105 = tpu.memref_slice %arg2[%100, %c0_i32_65] : memref<16x32xf32, #tpu.memory_space<any>> -> memref<1x32xf32, #tpu.memory_space<any>>
    %c6_i32_66 = arith.constant 6 : i32
    %c0_i32_67 = arith.constant 0 : i32
    %106 = tpu.memref_slice %arg13[%c6_i32_66, %c0_i32_67] : memref<16x32xf32, #tpu.memory_space<vmem>> -> memref<1x32xf32, #tpu.memory_space<vmem>>
    %107 = tpu.memref_slice %arg14[%c6_i32_64] : memref<16x!tpu.dma_semaphore, #tpu.memory_space<semaphore_mem>> -> memref<1x!tpu.dma_semaphore, #tpu.memory_space<semaphore_mem>>
    %108 = tpu.memref_squeeze %107 : memref<1x!tpu.dma_semaphore, #tpu.memory_space<semaphore_mem>> -> memref<!tpu.dma_semaphore, #tpu.memory_space<semaphore_mem>>
    tpu.enqueue_dma source(%105 : memref<1x32xf32, #tpu.memory_space<any>>) target(%106 : memref<1x32xf32, #tpu.memory_space<vmem>>) target_semaphore(%108 : memref<!tpu.dma_semaphore, #tpu.memory_space<semaphore_mem>>)
    %c14_i32 = arith.constant 14 : i32
    %c0_i32_68 = arith.constant 0 : i32
    %109 = tpu.memref_slice %arg2[%104, %c0_i32_68] : memref<16x32xf32, #tpu.memory_space<any>> -> memref<1x32xf32, #tpu.memory_space<any>>
    %c14_i32_69 = arith.constant 14 : i32
    %c0_i32_70 = arith.constant 0 : i32
    %110 = tpu.memref_slice %arg13[%c14_i32_69, %c0_i32_70] : memref<16x32xf32, #tpu.memory_space<vmem>> -> memref<1x32xf32, #tpu.memory_space<vmem>>
    %111 = tpu.memref_slice %arg14[%c14_i32] : memref<16x!tpu.dma_semaphore, #tpu.memory_space<semaphore_mem>> -> memref<1x!tpu.dma_semaphore, #tpu.memory_space<semaphore_mem>>
    %112 = tpu.memref_squeeze %111 : memref<1x!tpu.dma_semaphore, #tpu.memory_space<semaphore_mem>> -> memref<!tpu.dma_semaphore, #tpu.memory_space<semaphore_mem>>
    tpu.enqueue_dma source(%109 : memref<1x32xf32, #tpu.memory_space<any>>) target(%110 : memref<1x32xf32, #tpu.memory_space<vmem>>) target_semaphore(%112 : memref<!tpu.dma_semaphore, #tpu.memory_space<semaphore_mem>>)
    %c7_i32 = arith.constant 7 : i32
    %113 = arith.addi %0, %c7_i32 : i32
    %c2_i32_71 = arith.constant 2 : i32
    %114 = arith.muli %c2_i32_71, %113 : i32
    %115 = arith.index_cast %114 : i32 to index
    %116 = memref.load %arg1[%115] : memref<16xi32, #tpu.memory_space<smem>>
    %c2_i32_72 = arith.constant 2 : i32
    %117 = arith.muli %c2_i32_72, %113 : i32
    %c1_i32_73 = arith.constant 1 : i32
    %118 = arith.addi %117, %c1_i32_73 : i32
    %119 = arith.index_cast %118 : i32 to index
    %120 = memref.load %arg1[%119] : memref<16xi32, #tpu.memory_space<smem>>
    %c7_i32_74 = arith.constant 7 : i32
    %c0_i32_75 = arith.constant 0 : i32
    %121 = tpu.memref_slice %arg2[%116, %c0_i32_75] : memref<16x32xf32, #tpu.memory_space<any>> -> memref<1x32xf32, #tpu.memory_space<any>>
    %c7_i32_76 = arith.constant 7 : i32
    %c0_i32_77 = arith.constant 0 : i32
    %122 = tpu.memref_slice %arg13[%c7_i32_76, %c0_i32_77] : memref<16x32xf32, #tpu.memory_space<vmem>> -> memref<1x32xf32, #tpu.memory_space<vmem>>
    %123 = tpu.memref_slice %arg14[%c7_i32_74] : memref<16x!tpu.dma_semaphore, #tpu.memory_space<semaphore_mem>> -> memref<1x!tpu.dma_semaphore, #tpu.memory_space<semaphore_mem>>
    %124 = tpu.memref_squeeze %123 : memref<1x!tpu.dma_semaphore, #tpu.memory_space<semaphore_mem>> -> memref<!tpu.dma_semaphore, #tpu.memory_space<semaphore_mem>>
    tpu.enqueue_dma source(%121 : memref<1x32xf32, #tpu.memory_space<any>>) target(%122 : memref<1x32xf32, #tpu.memory_space<vmem>>) target_semaphore(%124 : memref<!tpu.dma_semaphore, #tpu.memory_space<semaphore_mem>>)
    %c15_i32 = arith.constant 15 : i32
    %c0_i32_78 = arith.constant 0 : i32
    %125 = tpu.memref_slice %arg2[%120, %c0_i32_78] : memref<16x32xf32, #tpu.memory_space<any>> -> memref<1x32xf32, #tpu.memory_space<any>>
    %c15_i32_79 = arith.constant 15 : i32
    %c0_i32_80 = arith.constant 0 : i32
    %126 = tpu.memref_slice %arg13[%c15_i32_79, %c0_i32_80] : memref<16x32xf32, #tpu.memory_space<vmem>> -> memref<1x32xf32, #tpu.memory_space<vmem>>
    %127 = tpu.memref_slice %arg14[%c15_i32] : memref<16x!tpu.dma_semaphore, #tpu.memory_space<semaphore_mem>> -> memref<1x!tpu.dma_semaphore, #tpu.memory_space<semaphore_mem>>
    %128 = tpu.memref_squeeze %127 : memref<1x!tpu.dma_semaphore, #tpu.memory_space<semaphore_mem>> -> memref<!tpu.dma_semaphore, #tpu.memory_space<semaphore_mem>>
    tpu.enqueue_dma source(%125 : memref<1x32xf32, #tpu.memory_space<any>>) target(%126 : memref<1x32xf32, #tpu.memory_space<vmem>>) target_semaphore(%128 : memref<!tpu.dma_semaphore, #tpu.memory_space<semaphore_mem>>)
    %c0_i32_81 = arith.constant 0 : i32
    %c0_i32_82 = arith.constant 0 : i32
    %129 = tpu.memref_slice %arg2[%4, %c0_i32_82] : memref<16x32xf32, #tpu.memory_space<any>> -> memref<1x32xf32, #tpu.memory_space<any>>
    %c0_i32_83 = arith.constant 0 : i32
    %c0_i32_84 = arith.constant 0 : i32
    %130 = tpu.memref_slice %arg13[%c0_i32_83, %c0_i32_84] : memref<16x32xf32, #tpu.memory_space<vmem>> -> memref<1x32xf32, #tpu.memory_space<vmem>>
    %131 = tpu.memref_slice %arg14[%c0_i32_81] : memref<16x!tpu.dma_semaphore, #tpu.memory_space<semaphore_mem>> -> memref<1x!tpu.dma_semaphore, #tpu.memory_space<semaphore_mem>>
    %132 = tpu.memref_squeeze %131 : memref<1x!tpu.dma_semaphore, #tpu.memory_space<semaphore_mem>> -> memref<!tpu.dma_semaphore, #tpu.memory_space<semaphore_mem>>
    tpu.wait_dma2 semaphore(%132 : memref<!tpu.dma_semaphore, #tpu.memory_space<semaphore_mem>>) src(%129 : memref<1x32xf32, #tpu.memory_space<any>>) dst(%130 : memref<1x32xf32, #tpu.memory_space<vmem>>)
    %c8_i32_85 = arith.constant 8 : i32
    %c0_i32_86 = arith.constant 0 : i32
    %133 = tpu.memref_slice %arg2[%8, %c0_i32_86] : memref<16x32xf32, #tpu.memory_space<any>> -> memref<1x32xf32, #tpu.memory_space<any>>
    %c8_i32_87 = arith.constant 8 : i32
    %c0_i32_88 = arith.constant 0 : i32
    %134 = tpu.memref_slice %arg13[%c8_i32_87, %c0_i32_88] : memref<16x32xf32, #tpu.memory_space<vmem>> -> memref<1x32xf32, #tpu.memory_space<vmem>>
    %135 = tpu.memref_slice %arg14[%c8_i32_85] : memref<16x!tpu.dma_semaphore, #tpu.memory_space<semaphore_mem>> -> memref<1x!tpu.dma_semaphore, #tpu.memory_space<semaphore_mem>>
    %136 = tpu.memref_squeeze %135 : memref<1x!tpu.dma_semaphore, #tpu.memory_space<semaphore_mem>> -> memref<!tpu.dma_semaphore, #tpu.memory_space<semaphore_mem>>
    tpu.wait_dma2 semaphore(%136 : memref<!tpu.dma_semaphore, #tpu.memory_space<semaphore_mem>>) src(%133 : memref<1x32xf32, #tpu.memory_space<any>>) dst(%134 : memref<1x32xf32, #tpu.memory_space<vmem>>)
    %c1_i32_89 = arith.constant 1 : i32
    %c0_i32_90 = arith.constant 0 : i32
    %137 = tpu.memref_slice %arg2[%20, %c0_i32_90] : memref<16x32xf32, #tpu.memory_space<any>> -> memref<1x32xf32, #tpu.memory_space<any>>
    %c1_i32_91 = arith.constant 1 : i32
    %c0_i32_92 = arith.constant 0 : i32
    %138 = tpu.memref_slice %arg13[%c1_i32_91, %c0_i32_92] : memref<16x32xf32, #tpu.memory_space<vmem>> -> memref<1x32xf32, #tpu.memory_space<vmem>>
    %139 = tpu.memref_slice %arg14[%c1_i32_89] : memref<16x!tpu.dma_semaphore, #tpu.memory_space<semaphore_mem>> -> memref<1x!tpu.dma_semaphore, #tpu.memory_space<semaphore_mem>>
    %140 = tpu.memref_squeeze %139 : memref<1x!tpu.dma_semaphore, #tpu.memory_space<semaphore_mem>> -> memref<!tpu.dma_semaphore, #tpu.memory_space<semaphore_mem>>
    tpu.wait_dma2 semaphore(%140 : memref<!tpu.dma_semaphore, #tpu.memory_space<semaphore_mem>>) src(%137 : memref<1x32xf32, #tpu.memory_space<any>>) dst(%138 : memref<1x32xf32, #tpu.memory_space<vmem>>)
    %c9_i32_93 = arith.constant 9 : i32
    %c0_i32_94 = arith.constant 0 : i32
    %141 = tpu.memref_slice %arg2[%24, %c0_i32_94] : memref<16x32xf32, #tpu.memory_space<any>> -> memref<1x32xf32, #tpu.memory_space<any>>
    %c9_i32_95 = arith.constant 9 : i32
    %c0_i32_96 = arith.constant 0 : i32
    %142 = tpu.memref_slice %arg13[%c9_i32_95, %c0_i32_96] : memref<16x32xf32, #tpu.memory_space<vmem>> -> memref<1x32xf32, #tpu.memory_space<vmem>>
    %143 = tpu.memref_slice %arg14[%c9_i32_93] : memref<16x!tpu.dma_semaphore, #tpu.memory_space<semaphore_mem>> -> memref<1x!tpu.dma_semaphore, #tpu.memory_space<semaphore_mem>>
    %144 = tpu.memref_squeeze %143 : memref<1x!tpu.dma_semaphore, #tpu.memory_space<semaphore_mem>> -> memref<!tpu.dma_semaphore, #tpu.memory_space<semaphore_mem>>
    tpu.wait_dma2 semaphore(%144 : memref<!tpu.dma_semaphore, #tpu.memory_space<semaphore_mem>>) src(%141 : memref<1x32xf32, #tpu.memory_space<any>>) dst(%142 : memref<1x32xf32, #tpu.memory_space<vmem>>)
    %c2_i32_97 = arith.constant 2 : i32
    %c0_i32_98 = arith.constant 0 : i32
    %145 = tpu.memref_slice %arg2[%36, %c0_i32_98] : memref<16x32xf32, #tpu.memory_space<any>> -> memref<1x32xf32, #tpu.memory_space<any>>
    %c2_i32_99 = arith.constant 2 : i32
    %c0_i32_100 = arith.constant 0 : i32
    %146 = tpu.memref_slice %arg13[%c2_i32_99, %c0_i32_100] : memref<16x32xf32, #tpu.memory_space<vmem>> -> memref<1x32xf32, #tpu.memory_space<vmem>>
    %147 = tpu.memref_slice %arg14[%c2_i32_97] : memref<16x!tpu.dma_semaphore, #tpu.memory_space<semaphore_mem>> -> memref<1x!tpu.dma_semaphore, #tpu.memory_space<semaphore_mem>>
    %148 = tpu.memref_squeeze %147 : memref<1x!tpu.dma_semaphore, #tpu.memory_space<semaphore_mem>> -> memref<!tpu.dma_semaphore, #tpu.memory_space<semaphore_mem>>
    tpu.wait_dma2 semaphore(%148 : memref<!tpu.dma_semaphore, #tpu.memory_space<semaphore_mem>>) src(%145 : memref<1x32xf32, #tpu.memory_space<any>>) dst(%146 : memref<1x32xf32, #tpu.memory_space<vmem>>)
    %c10_i32_101 = arith.constant 10 : i32
    %c0_i32_102 = arith.constant 0 : i32
    %149 = tpu.memref_slice %arg2[%40, %c0_i32_102] : memref<16x32xf32, #tpu.memory_space<any>> -> memref<1x32xf32, #tpu.memory_space<any>>
    %c10_i32_103 = arith.constant 10 : i32
    %c0_i32_104 = arith.constant 0 : i32
    %150 = tpu.memref_slice %arg13[%c10_i32_103, %c0_i32_104] : memref<16x32xf32, #tpu.memory_space<vmem>> -> memref<1x32xf32, #tpu.memory_space<vmem>>
    %151 = tpu.memref_slice %arg14[%c10_i32_101] : memref<16x!tpu.dma_semaphore, #tpu.memory_space<semaphore_mem>> -> memref<1x!tpu.dma_semaphore, #tpu.memory_space<semaphore_mem>>
    %152 = tpu.memref_squeeze %151 : memref<1x!tpu.dma_semaphore, #tpu.memory_space<semaphore_mem>> -> memref<!tpu.dma_semaphore, #tpu.memory_space<semaphore_mem>>
    tpu.wait_dma2 semaphore(%152 : memref<!tpu.dma_semaphore, #tpu.memory_space<semaphore_mem>>) src(%149 : memref<1x32xf32, #tpu.memory_space<any>>) dst(%150 : memref<1x32xf32, #tpu.memory_space<vmem>>)
    %c3_i32_105 = arith.constant 3 : i32
    %c0_i32_106 = arith.constant 0 : i32
    %153 = tpu.memref_slice %arg2[%52, %c0_i32_106] : memref<16x32xf32, #tpu.memory_space<any>> -> memref<1x32xf32, #tpu.memory_space<any>>
    %c3_i32_107 = arith.constant 3 : i32
    %c0_i32_108 = arith.constant 0 : i32
    %154 = tpu.memref_slice %arg13[%c3_i32_107, %c0_i32_108] : memref<16x32xf32, #tpu.memory_space<vmem>> -> memref<1x32xf32, #tpu.memory_space<vmem>>
    %155 = tpu.memref_slice %arg14[%c3_i32_105] : memref<16x!tpu.dma_semaphore, #tpu.memory_space<semaphore_mem>> -> memref<1x!tpu.dma_semaphore, #tpu.memory_space<semaphore_mem>>
    %156 = tpu.memref_squeeze %155 : memref<1x!tpu.dma_semaphore, #tpu.memory_space<semaphore_mem>> -> memref<!tpu.dma_semaphore, #tpu.memory_space<semaphore_mem>>
    tpu.wait_dma2 semaphore(%156 : memref<!tpu.dma_semaphore, #tpu.memory_space<semaphore_mem>>) src(%153 : memref<1x32xf32, #tpu.memory_space<any>>) dst(%154 : memref<1x32xf32, #tpu.memory_space<vmem>>)
    %c11_i32_109 = arith.constant 11 : i32
    %c0_i32_110 = arith.constant 0 : i32
    %157 = tpu.memref_slice %arg2[%56, %c0_i32_110] : memref<16x32xf32, #tpu.memory_space<any>> -> memref<1x32xf32, #tpu.memory_space<any>>
    %c11_i32_111 = arith.constant 11 : i32
    %c0_i32_112 = arith.constant 0 : i32
    %158 = tpu.memref_slice %arg13[%c11_i32_111, %c0_i32_112] : memref<16x32xf32, #tpu.memory_space<vmem>> -> memref<1x32xf32, #tpu.memory_space<vmem>>
    %159 = tpu.memref_slice %arg14[%c11_i32_109] : memref<16x!tpu.dma_semaphore, #tpu.memory_space<semaphore_mem>> -> memref<1x!tpu.dma_semaphore, #tpu.memory_space<semaphore_mem>>
    %160 = tpu.memref_squeeze %159 : memref<1x!tpu.dma_semaphore, #tpu.memory_space<semaphore_mem>> -> memref<!tpu.dma_semaphore, #tpu.memory_space<semaphore_mem>>
    tpu.wait_dma2 semaphore(%160 : memref<!tpu.dma_semaphore, #tpu.memory_space<semaphore_mem>>) src(%157 : memref<1x32xf32, #tpu.memory_space<any>>) dst(%158 : memref<1x32xf32, #tpu.memory_space<vmem>>)
    %c4_i32_113 = arith.constant 4 : i32
    %c0_i32_114 = arith.constant 0 : i32
    %161 = tpu.memref_slice %arg2[%68, %c0_i32_114] : memref<16x32xf32, #tpu.memory_space<any>> -> memref<1x32xf32, #tpu.memory_space<any>>
    %c4_i32_115 = arith.constant 4 : i32
    %c0_i32_116 = arith.constant 0 : i32
    %162 = tpu.memref_slice %arg13[%c4_i32_115, %c0_i32_116] : memref<16x32xf32, #tpu.memory_space<vmem>> -> memref<1x32xf32, #tpu.memory_space<vmem>>
    %163 = tpu.memref_slice %arg14[%c4_i32_113] : memref<16x!tpu.dma_semaphore, #tpu.memory_space<semaphore_mem>> -> memref<1x!tpu.dma_semaphore, #tpu.memory_space<semaphore_mem>>
    %164 = tpu.memref_squeeze %163 : memref<1x!tpu.dma_semaphore, #tpu.memory_space<semaphore_mem>> -> memref<!tpu.dma_semaphore, #tpu.memory_space<semaphore_mem>>
    tpu.wait_dma2 semaphore(%164 : memref<!tpu.dma_semaphore, #tpu.memory_space<semaphore_mem>>) src(%161 : memref<1x32xf32, #tpu.memory_space<any>>) dst(%162 : memref<1x32xf32, #tpu.memory_space<vmem>>)
    %c12_i32_117 = arith.constant 12 : i32
    %c0_i32_118 = arith.constant 0 : i32
    %165 = tpu.memref_slice %arg2[%72, %c0_i32_118] : memref<16x32xf32, #tpu.memory_space<any>> -> memref<1x32xf32, #tpu.memory_space<any>>
    %c12_i32_119 = arith.constant 12 : i32
    %c0_i32_120 = arith.constant 0 : i32
    %166 = tpu.memref_slice %arg13[%c12_i32_119, %c0_i32_120] : memref<16x32xf32, #tpu.memory_space<vmem>> -> memref<1x32xf32, #tpu.memory_space<vmem>>
    %167 = tpu.memref_slice %arg14[%c12_i32_117] : memref<16x!tpu.dma_semaphore, #tpu.memory_space<semaphore_mem>> -> memref<1x!tpu.dma_semaphore, #tpu.memory_space<semaphore_mem>>
    %168 = tpu.memref_squeeze %167 : memref<1x!tpu.dma_semaphore, #tpu.memory_space<semaphore_mem>> -> memref<!tpu.dma_semaphore, #tpu.memory_space<semaphore_mem>>
    tpu.wait_dma2 semaphore(%168 : memref<!tpu.dma_semaphore, #tpu.memory_space<semaphore_mem>>) src(%165 : memref<1x32xf32, #tpu.memory_space<any>>) dst(%166 : memref<1x32xf32, #tpu.memory_space<vmem>>)
    %c5_i32_121 = arith.constant 5 : i32
    %c0_i32_122 = arith.constant 0 : i32
    %169 = tpu.memref_slice %arg2[%84, %c0_i32_122] : memref<16x32xf32, #tpu.memory_space<any>> -> memref<1x32xf32, #tpu.memory_space<any>>
    %c5_i32_123 = arith.constant 5 : i32
    %c0_i32_124 = arith.constant 0 : i32
    %170 = tpu.memref_slice %arg13[%c5_i32_123, %c0_i32_124] : memref<16x32xf32, #tpu.memory_space<vmem>> -> memref<1x32xf32, #tpu.memory_space<vmem>>
    %171 = tpu.memref_slice %arg14[%c5_i32_121] : memref<16x!tpu.dma_semaphore, #tpu.memory_space<semaphore_mem>> -> memref<1x!tpu.dma_semaphore, #tpu.memory_space<semaphore_mem>>
    %172 = tpu.memref_squeeze %171 : memref<1x!tpu.dma_semaphore, #tpu.memory_space<semaphore_mem>> -> memref<!tpu.dma_semaphore, #tpu.memory_space<semaphore_mem>>
    tpu.wait_dma2 semaphore(%172 : memref<!tpu.dma_semaphore, #tpu.memory_space<semaphore_mem>>) src(%169 : memref<1x32xf32, #tpu.memory_space<any>>) dst(%170 : memref<1x32xf32, #tpu.memory_space<vmem>>)
    %c13_i32_125 = arith.constant 13 : i32
    %c0_i32_126 = arith.constant 0 : i32
    %173 = tpu.memref_slice %arg2[%88, %c0_i32_126] : memref<16x32xf32, #tpu.memory_space<any>> -> memref<1x32xf32, #tpu.memory_space<any>>
    %c13_i32_127 = arith.constant 13 : i32
    %c0_i32_128 = arith.constant 0 : i32
    %174 = tpu.memref_slice %arg13[%c13_i32_127, %c0_i32_128] : memref<16x32xf32, #tpu.memory_space<vmem>> -> memref<1x32xf32, #tpu.memory_space<vmem>>
    %175 = tpu.memref_slice %arg14[%c13_i32_125] : memref<16x!tpu.dma_semaphore, #tpu.memory_space<semaphore_mem>> -> memref<1x!tpu.dma_semaphore, #tpu.memory_space<semaphore_mem>>
    %176 = tpu.memref_squeeze %175 : memref<1x!tpu.dma_semaphore, #tpu.memory_space<semaphore_mem>> -> memref<!tpu.dma_semaphore, #tpu.memory_space<semaphore_mem>>
    tpu.wait_dma2 semaphore(%176 : memref<!tpu.dma_semaphore, #tpu.memory_space<semaphore_mem>>) src(%173 : memref<1x32xf32, #tpu.memory_space<any>>) dst(%174 : memref<1x32xf32, #tpu.memory_space<vmem>>)
    %c6_i32_129 = arith.constant 6 : i32
    %c0_i32_130 = arith.constant 0 : i32
    %177 = tpu.memref_slice %arg2[%100, %c0_i32_130] : memref<16x32xf32, #tpu.memory_space<any>> -> memref<1x32xf32, #tpu.memory_space<any>>
    %c6_i32_131 = arith.constant 6 : i32
    %c0_i32_132 = arith.constant 0 : i32
    %178 = tpu.memref_slice %arg13[%c6_i32_131, %c0_i32_132] : memref<16x32xf32, #tpu.memory_space<vmem>> -> memref<1x32xf32, #tpu.memory_space<vmem>>
    %179 = tpu.memref_slice %arg14[%c6_i32_129] : memref<16x!tpu.dma_semaphore, #tpu.memory_space<semaphore_mem>> -> memref<1x!tpu.dma_semaphore, #tpu.memory_space<semaphore_mem>>
    %180 = tpu.memref_squeeze %179 : memref<1x!tpu.dma_semaphore, #tpu.memory_space<semaphore_mem>> -> memref<!tpu.dma_semaphore, #tpu.memory_space<semaphore_mem>>
    tpu.wait_dma2 semaphore(%180 : memref<!tpu.dma_semaphore, #tpu.memory_space<semaphore_mem>>) src(%177 : memref<1x32xf32, #tpu.memory_space<any>>) dst(%178 : memref<1x32xf32, #tpu.memory_space<vmem>>)
    %c14_i32_133 = arith.constant 14 : i32
    %c0_i32_134 = arith.constant 0 : i32
    %181 = tpu.memref_slice %arg2[%104, %c0_i32_134] : memref<16x32xf32, #tpu.memory_space<any>> -> memref<1x32xf32, #tpu.memory_space<any>>
    %c14_i32_135 = arith.constant 14 : i32
    %c0_i32_136 = arith.constant 0 : i32
    %182 = tpu.memref_slice %arg13[%c14_i32_135, %c0_i32_136] : memref<16x32xf32, #tpu.memory_space<vmem>> -> memref<1x32xf32, #tpu.memory_space<vmem>>
    %183 = tpu.memref_slice %arg14[%c14_i32_133] : memref<16x!tpu.dma_semaphore, #tpu.memory_space<semaphore_mem>> -> memref<1x!tpu.dma_semaphore, #tpu.memory_space<semaphore_mem>>
    %184 = tpu.memref_squeeze %183 : memref<1x!tpu.dma_semaphore, #tpu.memory_space<semaphore_mem>> -> memref<!tpu.dma_semaphore, #tpu.memory_space<semaphore_mem>>
    tpu.wait_dma2 semaphore(%184 : memref<!tpu.dma_semaphore, #tpu.memory_space<semaphore_mem>>) src(%181 : memref<1x32xf32, #tpu.memory_space<any>>) dst(%182 : memref<1x32xf32, #tpu.memory_space<vmem>>)
    %c7_i32_137 = arith.constant 7 : i32
    %c0_i32_138 = arith.constant 0 : i32
    %185 = tpu.memref_slice %arg2[%116, %c0_i32_138] : memref<16x32xf32, #tpu.memory_space<any>> -> memref<1x32xf32, #tpu.memory_space<any>>
    %c7_i32_139 = arith.constant 7 : i32
    %c0_i32_140 = arith.constant 0 : i32
    %186 = tpu.memref_slice %arg13[%c7_i32_139, %c0_i32_140] : memref<16x32xf32, #tpu.memory_space<vmem>> -> memref<1x32xf32, #tpu.memory_space<vmem>>
    %187 = tpu.memref_slice %arg14[%c7_i32_137] : memref<16x!tpu.dma_semaphore, #tpu.memory_space<semaphore_mem>> -> memref<1x!tpu.dma_semaphore, #tpu.memory_space<semaphore_mem>>
    %188 = tpu.memref_squeeze %187 : memref<1x!tpu.dma_semaphore, #tpu.memory_space<semaphore_mem>> -> memref<!tpu.dma_semaphore, #tpu.memory_space<semaphore_mem>>
    tpu.wait_dma2 semaphore(%188 : memref<!tpu.dma_semaphore, #tpu.memory_space<semaphore_mem>>) src(%185 : memref<1x32xf32, #tpu.memory_space<any>>) dst(%186 : memref<1x32xf32, #tpu.memory_space<vmem>>)
    %c15_i32_141 = arith.constant 15 : i32
    %c0_i32_142 = arith.constant 0 : i32
    %189 = tpu.memref_slice %arg2[%120, %c0_i32_142] : memref<16x32xf32, #tpu.memory_space<any>> -> memref<1x32xf32, #tpu.memory_space<any>>
    %c15_i32_143 = arith.constant 15 : i32
    %c0_i32_144 = arith.constant 0 : i32
    %190 = tpu.memref_slice %arg13[%c15_i32_143, %c0_i32_144] : memref<16x32xf32, #tpu.memory_space<vmem>> -> memref<1x32xf32, #tpu.memory_space<vmem>>
    %191 = tpu.memref_slice %arg14[%c15_i32_141] : memref<16x!tpu.dma_semaphore, #tpu.memory_space<semaphore_mem>> -> memref<1x!tpu.dma_semaphore, #tpu.memory_space<semaphore_mem>>
    %192 = tpu.memref_squeeze %191 : memref<1x!tpu.dma_semaphore, #tpu.memory_space<semaphore_mem>> -> memref<!tpu.dma_semaphore, #tpu.memory_space<semaphore_mem>>
    tpu.wait_dma2 semaphore(%192 : memref<!tpu.dma_semaphore, #tpu.memory_space<semaphore_mem>>) src(%189 : memref<1x32xf32, #tpu.memory_space<any>>) dst(%190 : memref<1x32xf32, #tpu.memory_space<vmem>>)
    %c0 = arith.constant 0 : index
    %c0_145 = arith.constant 0 : index
    %193 = vector.load %arg13[%c0, %c0_145] : memref<16x32xf32, #tpu.memory_space<vmem>>, vector<16x32xf32>
    %194 = vector.extract_strided_slice %193 {offsets = [0, 0], sizes = [8, 32], strides = [1, 1]} : vector<16x32xf32> to vector<8x32xf32>
    %195 = arith.truncf %194 : vector<8x32xf32> to vector<8x32xbf16>
    %196 = vector.extract_strided_slice %193 {offsets = [8, 0], sizes = [8, 32], strides = [1, 1]} : vector<16x32xf32> to vector<8x32xf32>
    %197 = arith.truncf %196 : vector<8x32xf32> to vector<8x32xbf16>
    %c0_146 = arith.constant 0 : index
    %c0_147 = arith.constant 0 : index
    %198 = vector.load %arg3[%c0_146, %c0_147] : memref<32x1024xbf16, #tpu.memory_space<vmem>>, vector<32x1024xbf16>
    %c0_148 = arith.constant 0 : index
    %c0_149 = arith.constant 0 : index
    %199 = vector.load %arg4[%c0_148, %c0_149] : memref<1x1024xf32, #tpu.memory_space<vmem>>, vector<1x1024xf32>
    %c0_150 = arith.constant 0 : index
    %c0_151 = arith.constant 0 : index
    %200 = vector.load %arg5[%c0_150, %c0_151] : memref<1024x128xbf16, #tpu.memory_space<vmem>>, vector<1024x128xbf16>
    %c0_152 = arith.constant 0 : index
    %c0_153 = arith.constant 0 : index
    %201 = vector.load %arg6[%c0_152, %c0_153] : memref<1x128xf32, #tpu.memory_space<vmem>>, vector<1x128xf32>
    %cst = arith.constant dense<0.000000e+00> : vector<8x1024xf32>
    %202 = tpu.matmul %195, %198, %cst {dimension_numbers = #tpu.dot_dimension_numbers<[1], [0], [0], [1], [0, 0, 1, 1], [], []>} : vector<8x32xbf16>, vector<32x1024xbf16>, vector<8x1024xf32> -> vector<8x1024xf32>
    %203 = vector.broadcast %199 : vector<1x1024xf32> to vector<8x1024xf32>
    %204 = arith.addf %202, %203 : vector<8x1024xf32>
    %cst_154 = arith.constant 0.000000e+00 : f32
    %205 = vector.broadcast %cst_154 : f32 to vector<8x1024xf32>
    %206 = arith.maximumf %204, %205 : vector<8x1024xf32>
    %207 = arith.truncf %206 : vector<8x1024xf32> to vector<8x1024xbf16>
    %cst_155 = arith.constant dense<0.000000e+00> : vector<8x128xf32>
    %208 = tpu.matmul %207, %200, %cst_155 {dimension_numbers = #tpu.dot_dimension_numbers<[1], [0], [0], [1], [0, 0, 1, 1], [], []>} : vector<8x1024xbf16>, vector<1024x128xbf16>, vector<8x128xf32> -> vector<8x128xf32>
    %209 = vector.broadcast %201 : vector<1x128xf32> to vector<8x128xf32>
    %210 = arith.addf %208, %209 : vector<8x128xf32>
    %c0_156 = arith.constant 0 : index
    %c0_157 = arith.constant 0 : index
    %211 = vector.load %arg11[%c0_156, %c0_157] : memref<8x128xf32, #tpu.memory_space<vmem>>, vector<8x128xf32>
    tpu.vector_store %arg11[%c0_156, %c0_157], %210 {strides = array<i32>} : memref<8x128xf32, #tpu.memory_space<vmem>>, vector<8x128xf32>,
    %c0_158 = arith.constant 0 : index
    %c0_159 = arith.constant 0 : index
    %212 = vector.load %arg7[%c0_158, %c0_159] : memref<32x256xbf16, #tpu.memory_space<vmem>>, vector<32x256xbf16>
    %c0_160 = arith.constant 0 : index
    %c0_161 = arith.constant 0 : index
    %213 = vector.load %arg8[%c0_160, %c0_161] : memref<1x256xf32, #tpu.memory_space<vmem>>, vector<1x256xf32>
    %c0_162 = arith.constant 0 : index
    %c0_163 = arith.constant 0 : index
    %214 = vector.load %arg9[%c0_162, %c0_163] : memref<256x128xbf16, #tpu.memory_space<vmem>>, vector<256x128xbf16>
    %c0_164 = arith.constant 0 : index
    %c0_165 = arith.constant 0 : index
    %215 = vector.load %arg10[%c0_164, %c0_165] : memref<1x128xf32, #tpu.memory_space<vmem>>, vector<1x128xf32>
    %cst_166 = arith.constant dense<0.000000e+00> : vector<8x256xf32>
    %216 = tpu.matmul %197, %212, %cst_166 {dimension_numbers = #tpu.dot_dimension_numbers<[1], [0], [0], [1], [0, 0, 1, 1], [], []>} : vector<8x32xbf16>, vector<32x256xbf16>, vector<8x256xf32> -> vector<8x256xf32>
    %217 = vector.broadcast %213 : vector<1x256xf32> to vector<8x256xf32>
    %218 = arith.addf %216, %217 : vector<8x256xf32>
    %cst_167 = arith.constant 0.000000e+00 : f32
    %219 = vector.broadcast %cst_167 : f32 to vector<8x256xf32>
    %220 = arith.maximumf %218, %219 : vector<8x256xf32>
    %221 = arith.truncf %220 : vector<8x256xf32> to vector<8x256xbf16>
    %cst_168 = arith.constant dense<0.000000e+00> : vector<8x128xf32>
    %222 = tpu.matmul %221, %214, %cst_168 {dimension_numbers = #tpu.dot_dimension_numbers<[1], [0], [0], [1], [0, 0, 1, 1], [], []>} : vector<8x256xbf16>, vector<256x128xbf16>, vector<8x128xf32> -> vector<8x128xf32>
    %223 = vector.broadcast %215 : vector<1x128xf32> to vector<8x128xf32>
    %224 = arith.addf %222, %223 : vector<8x128xf32>
    %c0_169 = arith.constant 0 : index
    %c0_170 = arith.constant 0 : index
    %225 = vector.load %arg12[%c0_169, %c0_170] : memref<8x128xf32, #tpu.memory_space<vmem>>, vector<8x128xf32>
    tpu.vector_store %arg12[%c0_169, %c0_170], %224 {strides = array<i32>} : memref<8x128xf32, #tpu.memory_space<vmem>>, vector<8x128xf32>,
    return
  }
  func.func @transform_1(%arg0: i32, %arg1: memref<16xi32, #tpu.memory_space<smem>>) -> (i32, i32) {
    %c0_i32 = arith.constant 0 : i32
    %c0_i32_0 = arith.constant 0 : i32
    %c0_i32_1 = arith.constant 0 : i32
    return %c0_i32, %c0_i32_0 : i32, i32
  }
  func.func @transform_2(%arg0: i32, %arg1: memref<16xi32, #tpu.memory_space<smem>>) -> (i32, i32) {
    %c0_i32 = arith.constant 0 : i32
    %c0_i32_0 = arith.constant 0 : i32
    %c0_i32_1 = arith.constant 0 : i32
    return %c0_i32, %c0_i32_0 : i32, i32
  }
  func.func @transform_3(%arg0: i32, %arg1: memref<16xi32, #tpu.memory_space<smem>>) -> (i32, i32) {
    %c0_i32 = arith.constant 0 : i32
    %c0_i32_0 = arith.constant 0 : i32
    %c0_i32_1 = arith.constant 0 : i32
    return %c0_i32, %c0_i32_0 : i32, i32
  }
  func.func @transform_4(%arg0: i32, %arg1: memref<16xi32, #tpu.memory_space<smem>>) -> (i32, i32) {
    %c0_i32 = arith.constant 0 : i32
    %c0_i32_0 = arith.constant 0 : i32
    %c0_i32_1 = arith.constant 0 : i32
    return %c0_i32, %c0_i32_0 : i32, i32
  }
  func.func @transform_5(%arg0: i32, %arg1: memref<16xi32, #tpu.memory_space<smem>>) -> (i32, i32) {
    %c0_i32 = arith.constant 0 : i32
    %c0_i32_0 = arith.constant 0 : i32
    %c0_i32_1 = arith.constant 0 : i32
    return %c0_i32, %c0_i32_0 : i32, i32
  }
  func.func @transform_6(%arg0: i32, %arg1: memref<16xi32, #tpu.memory_space<smem>>) -> (i32, i32) {
    %c0_i32 = arith.constant 0 : i32
    %c0_i32_0 = arith.constant 0 : i32
    %c0_i32_1 = arith.constant 0 : i32
    return %c0_i32, %c0_i32_0 : i32, i32
  }
  func.func @transform_7(%arg0: i32, %arg1: memref<16xi32, #tpu.memory_space<smem>>) -> (i32, i32) {
    %c0_i32 = arith.constant 0 : i32
    %c0_i32_0 = arith.constant 0 : i32
    %c0_i32_1 = arith.constant 0 : i32
    return %c0_i32, %c0_i32_0 : i32, i32
  }
  func.func @transform_8(%arg0: i32, %arg1: memref<16xi32, #tpu.memory_space<smem>>) -> (i32, i32) {
    %c0_i32 = arith.constant 0 : i32
    %c0_i32_0 = arith.constant 0 : i32
    %c0_i32_1 = arith.constant 0 : i32
    return %c0_i32, %c0_i32_0 : i32, i32
  }
  func.func @transform_9(%arg0: i32, %arg1: memref<16xi32, #tpu.memory_space<smem>>) -> (i32, i32) {
    %c0_i32 = arith.constant 0 : i32
    %c0_i32_0 = arith.constant 0 : i32
    return %arg0, %c0_i32 : i32, i32
  }
  func.func @transform_10(%arg0: i32, %arg1: memref<16xi32, #tpu.memory_space<smem>>) -> (i32, i32) {
    %c0_i32 = arith.constant 0 : i32
    %c0_i32_0 = arith.constant 0 : i32
    return %arg0, %c0_i32 : i32, i32
  }
}

</mosaic_0001>

<llo_original>
// kernel: tpu_custom_call.1
$region0: #{tpu_custom_call.1}
  #allocation0 [shape = 'u32[]', space=smem, size = 0x4, offset = 0x4, fixed_abs, tag = 'smem constant byte address 0x4 - core index']
  #allocation1 [shape = 'u32[144,128]{1,0:T(1,128)}', space=vmem, size = 0x12000, scoped, tag = 'internal scratch']
  #allocation2 [shape = 'f32[16,32]{1,0:T(8,128)}', space=vmem, size = 0x2000, scoped, tag = 'scratch operand']
  #allocation3 [shape = 's32[16]{0}', space=sflag, size = 0x40, scoped, tag = 'scratch operand']
  #allocation4 [shape = 's32[1]{0}', space=sflag, size = 0x4, scoped, tag = 'scoped memory for tpu_custom_call.1']
  #allocation5 [shape = 'u8[512]{0}', space=smem, size = 0x200, scoped, tag = 'prefetched SMEM operand 0']
  #allocation17 [shape = 's32[]', space=sflag, size = 0x4, offset = 0, fixed_abs, tag = 'sflag constant byte address 0x0 - dummy sync flag']
  #allocation18 [shape = 's32[]', space=sflag, size = 0x4, offset = 0, fixed_abs, tag = 'sflag constant byte address 0x0 - dummy sync flag']
  #allocation19 [shape = 'u32[]', space=smem, size = 0x4, offset = 0x44, fixed_abs, tag = 'smem constant byte address 0x44 - assertion arg 0']
  #allocation20 [shape = 'u32[]', space=smem, size = 0x4, offset = 0x48, fixed_abs, tag = 'smem constant byte address 0x48 - assertion arg 1']
  #allocation21 [shape = 's32[]', space=sflag, size = 0x4, offset = 0, fixed_abs, tag = 'sflag constant byte address 0x0 - dummy sync flag']
  #allocation22 [shape = 's32[]', space=sflag, size = 0x4, offset = 0, fixed_abs, tag = 'sflag constant byte address 0x0 - dummy sync flag']
  #allocation23 [shape = 's32[]', space=sflag, size = 0x4, offset = 0, fixed_abs, tag = 'sflag constant byte address 0x0 - dummy sync flag']
  #allocation24 [shape = 's32[]', space=sflag, size = 0x4, offset = 0, fixed_abs, tag = 'sflag constant byte address 0x0 - dummy sync flag']
  #allocation25 [shape = 's32[]', space=sflag, size = 0x4, offset = 0, fixed_abs, tag = 'sflag constant byte address 0x0 - dummy sync flag']
  #allocation26 [shape = 's32[]', space=sflag, size = 0x4, offset = 0, fixed_abs, tag = 'sflag constant byte address 0x0 - dummy sync flag']
  #allocation27 [shape = 's32[]', space=sflag, size = 0x4, offset = 0, fixed_abs, tag = 'sflag constant byte address 0x0 - dummy sync flag']
  #allocation28 [shape = 's32[]', space=sflag, size = 0x4, offset = 0, fixed_abs, tag = 'sflag constant byte address 0x0 - dummy sync flag']
  #allocation29 [shape = 's32[]', space=sflag, size = 0x4, offset = 0, fixed_abs, tag = 'sflag constant byte address 0x0 - dummy sync flag']
  #allocation30 [shape = 's32[]', space=sflag, size = 0x4, offset = 0, fixed_abs, tag = 'sflag constant byte address 0x0 - dummy sync flag']
  #allocation31 [shape = 's32[]', space=sflag, size = 0x4, offset = 0, fixed_abs, tag = 'sflag constant byte address 0x0 - dummy sync flag']
  #allocation32 [shape = 's32[]', space=sflag, size = 0x4, offset = 0, fixed_abs, tag = 'sflag constant byte address 0x0 - dummy sync flag']
  #allocation33 [shape = 's32[]', space=sflag, size = 0x4, offset = 0, fixed_abs, tag = 'sflag constant byte address 0x0 - dummy sync flag']
  #allocation34 [shape = 's32[]', space=sflag, size = 0x4, offset = 0, fixed_abs, tag = 'sflag constant byte address 0x0 - dummy sync flag']
  #allocation35 [shape = 's32[]', space=sflag, size = 0x4, offset = 0, fixed_abs, tag = 'sflag constant byte address 0x0 - dummy sync flag']
  #allocation36 [shape = 's32[]', space=sflag, size = 0x4, offset = 0, fixed_abs, tag = 'sflag constant byte address 0x0 - dummy sync flag']
  #allocation37 [shape = 's32[]', space=sflag, size = 0x4, offset = 0, fixed_abs, tag = 'sflag constant byte address 0x0 - dummy sync flag']
  #allocation38 [shape = 's32[]', space=sflag, size = 0x4, offset = 0, fixed_abs, tag = 'sflag constant byte address 0x0 - dummy sync flag']
  #allocation39 [shape = 's32[]', space=sflag, size = 0x4, offset = 0, fixed_abs, tag = 'sflag constant byte address 0x0 - dummy sync flag']
  #allocation40 [shape = 's32[]', space=sflag, size = 0x4, offset = 0, fixed_abs, tag = 'sflag constant byte address 0x0 - dummy sync flag']
  #allocation41 [shape = 's32[]', space=sflag, size = 0x4, offset = 0, fixed_abs, tag = 'sflag constant byte address 0x0 - dummy sync flag']
  #allocation42 [shape = 's32[]', space=sflag, size = 0x4, offset = 0, fixed_abs, tag = 'sflag constant byte address 0x0 - dummy sync flag']
  #allocation43 [shape = 's32[]', space=sflag, size = 0x4, offset = 0, fixed_abs, tag = 'sflag constant byte address 0x0 - dummy sync flag']
  #allocation44 [shape = 's32[]', space=sflag, size = 0x4, offset = 0, fixed_abs, tag = 'sflag constant byte address 0x0 - dummy sync flag']
  #allocation45 [shape = 's32[]', space=sflag, size = 0x4, offset = 0, fixed_abs, tag = 'sflag constant byte address 0x0 - dummy sync flag']
  #allocation46 [shape = 's32[]', space=sflag, size = 0x4, offset = 0, fixed_abs, tag = 'sflag constant byte address 0x0 - dummy sync flag']
  #allocation47 [shape = 's32[]', space=sflag, size = 0x4, offset = 0, fixed_abs, tag = 'sflag constant byte address 0x0 - dummy sync flag']
  #allocation48 [shape = 's32[]', space=sflag, size = 0x4, offset = 0, fixed_abs, tag = 'sflag constant byte address 0x0 - dummy sync flag']
  #allocation49 [shape = 's32[]', space=sflag, size = 0x4, offset = 0, fixed_abs, tag = 'sflag constant byte address 0x0 - dummy sync flag']
  #allocation50 [shape = 's32[]', space=sflag, size = 0x4, offset = 0, fixed_abs, tag = 'sflag constant byte address 0x0 - dummy sync flag']
  %s0 = inlined_call_operand.hbm [shape: s32[16], index: 0, kind: input, shape index: {}]
  %s1 = inlined_call_operand.hbm [shape: f32[16,32], index: 1, kind: input, shape index: {}]
  %s2 = inlined_call_operand.hbm [shape: bf16[32,1024], index: 2, kind: input, shape index: {}]
  %s3 = inlined_call_operand.vmem [shape: f32[1,1024], index: 3, kind: input, shape index: {}]
  %s4 = inlined_call_operand.hbm [shape: bf16[1024,128], index: 4, kind: input, shape index: {}]
  %s5 = inlined_call_operand.vmem [shape: f32[1,128], index: 5, kind: input, shape index: {}]
  %s6 = inlined_call_operand.hbm [shape: bf16[32,256], index: 6, kind: input, shape index: {}]
  %s7 = inlined_call_operand.vmem [shape: f32[1,256], index: 7, kind: input, shape index: {}]
  %s8 = inlined_call_operand.hbm [shape: bf16[256,128], index: 8, kind: input, shape index: {}]
  %s9 = inlined_call_operand.vmem [shape: f32[1,128], index: 9, kind: input, shape index: {}]
  %s10 = inlined_call_operand.hbm [shape: f32[8,128], index: 10, kind: output, shape index: {0}]
  %s11 = inlined_call_operand.hbm [shape: f32[8,128], index: 11, kind: output, shape index: {1}]
  %12 = xla_tuple %s10, %s11
  %s13 = sld [smem:[#allocation0]]
  $region130: #{tpu_custom_call.1} parent=0
    _
  %s15 = ssub.s32 1, %s13
  %s16 = scalar_select 0, %s15, %s13
  %18 = dma.hbm_to_smem %s0, 16, [#allocation5], [#allocation4]
  %19 = dma.done [#allocation4], 16
  %20 = sfence
  $region1: #{tpu_custom_call.1} parent=0
    #allocation6 [shape = 'u8[65536]{0}', space=vmem, size = 0x10000, scoped, tag = 'input window, operand 2, single buffered']
    #allocation7 [shape = 's32[1]{0}', space=sflag, size = 0x4, scoped, tag = 'scoped memory for tpu_custom_call.1']
    #allocation8 [shape = 's32[1]{0}', space=sflag, size = 0x4, scoped, tag = 'scoped memory for tpu_custom_call.1']
    #allocation9 [shape = 'u8[262144]{0}', space=vmem, size = 0x40000, scoped, tag = 'input window, operand 4, single buffered']
    #allocation10 [shape = 's32[1]{0}', space=sflag, size = 0x4, scoped, tag = 'scoped memory for tpu_custom_call.1']
    #allocation11 [shape = 'u8[16384]{0}', space=vmem, size = 0x4000, scoped, tag = 'input window, operand 6, single buffered']
    #allocation12 [shape = 'u8[65536]{0}', space=vmem, size = 0x10000, scoped, tag = 'input window, operand 8, single buffered']
    #allocation13 [shape = 's32[1]{0}', space=sflag, size = 0x4, scoped, tag = 'scoped memory for tpu_custom_call.1']
    #allocation14 [shape = 'u8[4096]{0}', space=vmem, size = 0x1000, scoped, tag = 'output window, operand 0, single buffered']
    #allocation15 [shape = 'u8[4096]{0}', space=vmem, size = 0x1000, scoped, tag = 'output window, operand 1, single buffered']
    #allocation16 [shape = 's32[1]{0}', space=sflag, size = 0x4, scoped, tag = 'scoped memory for tpu_custom_call.1']
    %21 = vsyncpa [#allocation7], 0
    %22 = vsyncpa [#allocation10], 0
    %23 = vsyncpa [#allocation13], 0
    %24 = vsyncpa [#allocation8], 0
    %25 = vsyncpa [#allocation16], 0
    // Predicated region
    $region2: #{tpu_custom_call.1} parent=1 // pred_check
      _
    $region3: #{tpu_custom_call.1} parent=1 // pred_check_branch
      %27 = sbr.rel (0) target = $region5
    $region4: #{tpu_custom_call.1} parent=1 // pred_region
      %s29 = ssub.s32 2048, 2048
      %30 = vsyncadd [#allocation7], %s29
      %s31 = sshll.u32 [#allocation6], 4
      %s32 = int_to_ptr.vmem [resolvable:$true] %s31
      %37 = dma.hbm_to_vmem [thread:$0]  %s2, 2048, %s32, [#allocation7], 512, 512, 32
    $region5: #{tpu_custom_call.1} parent=1 // pred_fallthru
      _
    // Predicated region
    $region6: #{tpu_custom_call.1} parent=1 // pred_check
      _
    $region7: #{tpu_custom_call.1} parent=1 // pred_check_branch
      %39 = sbr.rel (0) target = $region9
    $region8: #{tpu_custom_call.1} parent=1 // pred_region
      _
    $region9: #{tpu_custom_call.1} parent=1 // pred_fallthru
      _
    // Predicated region
    $region10: #{tpu_custom_call.1} parent=1 // pred_check
      _
    $region11: #{tpu_custom_call.1} parent=1 // pred_check_branch
      %41 = sbr.rel (0) target = $region13
    $region12: #{tpu_custom_call.1} parent=1 // pred_region
      %s43 = ssub.s32 8192, 8192
      %44 = vsyncadd [#allocation10], %s43
      %s45 = sshll.u32 [#allocation9], 4
      %s46 = int_to_ptr.vmem [resolvable:$true] %s45
      %51 = dma.hbm_to_vmem [thread:$0]  %s4, 8192, %s46, [#allocation10], 64, 64, 4
    $region13: #{tpu_custom_call.1} parent=1 // pred_fallthru
      _
    // Predicated region
    $region14: #{tpu_custom_call.1} parent=1 // pred_check
      _
    $region15: #{tpu_custom_call.1} parent=1 // pred_check_branch
      %53 = sbr.rel (0) target = $region17
    $region16: #{tpu_custom_call.1} parent=1 // pred_region
      _
    $region17: #{tpu_custom_call.1} parent=1 // pred_fallthru
      _
    // Predicated region
    $region18: #{tpu_custom_call.1} parent=1 // pred_check
      _
    $region19: #{tpu_custom_call.1} parent=1 // pred_check_branch
      %55 = sbr.rel (0) target = $region21
    $region20: #{tpu_custom_call.1} parent=1 // pred_region
      %s57 = ssub.s32 512, 512
      %58 = vsyncadd [#allocation10], %s57
      %s59 = sshll.u32 [#allocation11], 4
      %s60 = int_to_ptr.vmem [resolvable:$true] %s59
      %65 = dma.hbm_to_vmem [thread:$0]  %s6, 512, %s60, [#allocation10], 128, 128, 8
    $region21: #{tpu_custom_call.1} parent=1 // pred_fallthru
      _
    // Predicated region
    $region22: #{tpu_custom_call.1} parent=1 // pred_check
      _
    $region23: #{tpu_custom_call.1} parent=1 // pred_check_branch
      %67 = sbr.rel (0) target = $region25
    $region24: #{tpu_custom_call.1} parent=1 // pred_region
      _
    $region25: #{tpu_custom_call.1} parent=1 // pred_fallthru
      _
    // Predicated region
    $region26: #{tpu_custom_call.1} parent=1 // pred_check
      _
    $region27: #{tpu_custom_call.1} parent=1 // pred_check_branch
      %69 = sbr.rel (0) target = $region29
    $region28: #{tpu_custom_call.1} parent=1 // pred_region
      %s71 = ssub.s32 2048, 2048
      %72 = vsyncadd [#allocation13], %s71
      %s73 = sshll.u32 [#allocation12], 4
      %s74 = int_to_ptr.vmem [resolvable:$true] %s73
      %79 = dma.hbm_to_vmem [thread:$0]  %s8, 2048, %s74, [#allocation13], 64, 64, 4
    $region29: #{tpu_custom_call.1} parent=1 // pred_fallthru
      _
    // Predicated region
    $region30: #{tpu_custom_call.1} parent=1 // pred_check
      _
    $region31: #{tpu_custom_call.1} parent=1 // pred_check_branch
      %81 = sbr.rel (0) target = $region33
    $region32: #{tpu_custom_call.1} parent=1 // pred_region
      _
    $region33: #{tpu_custom_call.1} parent=1 // pred_fallthru
      _
    // Predicated region
    $region34: #{tpu_custom_call.1} parent=1 // pred_check
      _
    $region35: #{tpu_custom_call.1} parent=1 // pred_check_branch
      %83 = sbr.rel (0) target = $region37
    $region36: #{tpu_custom_call.1} parent=1 // pred_region
      %84 = dma.done [#allocation7], 2048
    $region37: #{tpu_custom_call.1} parent=1 // pred_fallthru
      _
    // Predicated region
    $region38: #{tpu_custom_call.1} parent=1 // pred_check
      _
    $region39: #{tpu_custom_call.1} parent=1 // pred_check_branch
      %86 = sbr.rel (0) target = $region41
    $region40: #{tpu_custom_call.1} parent=1 // pred_region
      %87 = dma.done [#allocation10], 8192
    $region41: #{tpu_custom_call.1} parent=1 // pred_fallthru
      _
    // Predicated region
    $region42: #{tpu_custom_call.1} parent=1 // pred_check
      _
    $region43: #{tpu_custom_call.1} parent=1 // pred_check_branch
      %89 = sbr.rel (0) target = $region45
    $region44: #{tpu_custom_call.1} parent=1 // pred_region
      %90 = dma.done [#allocation10], 512
    $region45: #{tpu_custom_call.1} parent=1 // pred_fallthru
      _
    // Predicated region
    $region46: #{tpu_custom_call.1} parent=1 // pred_check
      _
    $region47: #{tpu_custom_call.1} parent=1 // pred_check_branch
      %92 = sbr.rel (0) target = $region49
    $region48: #{tpu_custom_call.1} parent=1 // pred_region
      %93 = dma.done [#allocation13], 2048
    $region49: #{tpu_custom_call.1} parent=1 // pred_fallthru
      _
    %s95 = smul.u32 0, 8
    %s96 = smul.u32 0, 16
    %s97 = sld [smem:[#allocation5 + %s96]]
    %s98 = sadd.s32 %s96, 1
    %s99 = sld [smem:[#allocation5 + %s98]]
    %s100 = smul.addr %s97, 16
    %s101 = scalar_lea.hbm %s1, %s100
    // Predicated region
    $region50: #{tpu_custom_call.1} parent=1 // pred_check
      _
    $region51: #{tpu_custom_call.1} parent=1 // pred_check_branch
      %103 = sbr.rel target = $region53
    $region52: #{tpu_custom_call.1} parent=1 // pred_region
      %104 = sst [smem:[#allocation19]] [#allocation18]
      %105 = sst [smem:[#allocation20]] [#allocation17]
    $region53: #{tpu_custom_call.1} parent=1 // pred_fallthru
      _
    %107 = shalt.err (0)
    %s109 = sshll.u32 [#allocation2], 4
    %s110 = int_to_ptr.vmem [resolvable:$true] %s109
    %112 = dma.hbm_to_vmem [thread:$0]  %s101, 16, %s110, [#allocation3]
    %s113 = smul.addr %s99, 16
    %s114 = scalar_lea.hbm %s1, %s113
    %s115 = scalar_lea.vmem [#allocation2], 8
    %s116 = scalar_lea.sflag [#allocation3], 8
    // Predicated region
    $region54: #{tpu_custom_call.1} parent=1 // pred_check
      _
    $region55: #{tpu_custom_call.1} parent=1 // pred_check_branch
      %118 = sbr.rel target = $region57
    $region56: #{tpu_custom_call.1} parent=1 // pred_region
      %119 = sst [smem:[#allocation19]] [#allocation22]
      %120 = sst [smem:[#allocation20]] [#allocation21]
    $region57: #{tpu_custom_call.1} parent=1 // pred_fallthru
      _
    %122 = shalt.err (0)
    %s124 = sshll.u32 %s115, 4
    %s125 = int_to_ptr.vmem [resolvable:$true] %s124
    %127 = dma.hbm_to_vmem [thread:$0]  %s114, 16, %s125, %s116
    %s128 = sadd.s32 %s95, 1
    %s129 = smul.u32 %s128, 2
    %s130 = sld [smem:[#allocation5 + %s129]]
    %s131 = sadd.s32 %s129, 1
    %s132 = sld [smem:[#allocation5 + %s131]]
    %s133 = smul.addr %s130, 16
    %s134 = scalar_lea.hbm %s1, %s133
    %s135 = scalar_lea.vmem [#allocation2], 1
    %s136 = scalar_lea.sflag [#allocation3], 1
    // Predicated region
    $region58: #{tpu_custom_call.1} parent=1 // pred_check
      _
    $region59: #{tpu_custom_call.1} parent=1 // pred_check_branch
      %138 = sbr.rel target = $region61
    $region60: #{tpu_custom_call.1} parent=1 // pred_region
      %139 = sst [smem:[#allocation19]] [#allocation24]
      %140 = sst [smem:[#allocation20]] [#allocation23]
    $region61: #{tpu_custom_call.1} parent=1 // pred_fallthru
      _
    %142 = shalt.err (0)
    %s144 = sshll.u32 %s135, 4
    %s145 = int_to_ptr.vmem [resolvable:$true] %s144
    %147 = dma.hbm_to_vmem [thread:$0]  %s134, 16, %s145, %s136
    %s148 = smul.addr %s132, 16
    %s149 = scalar_lea.hbm %s1, %s148
    %s150 = scalar_lea.vmem [#allocation2], 9
    %s151 = scalar_lea.sflag [#allocation3], 9
    // Predicated region
    $region62: #{tpu_custom_call.1} parent=1 // pred_check
      _
    $region63: #{tpu_custom_call.1} parent=1 // pred_check_branch
      %153 = sbr.rel target = $region65
    $region64: #{tpu_custom_call.1} parent=1 // pred_region
      %154 = sst [smem:[#allocation19]] [#allocation26]
      %155 = sst [smem:[#allocation20]] [#allocation25]
    $region65: #{tpu_custom_call.1} parent=1 // pred_fallthru
      _
    %157 = shalt.err (0)
    %s159 = sshll.u32 %s150, 4
    %s160 = int_to_ptr.vmem [resolvable:$true] %s159
    %162 = dma.hbm_to_vmem [thread:$0]  %s149, 16, %s160, %s151
    %s163 = sadd.s32 %s95, 2
    %s164 = smul.u32 %s163, 2
    %s165 = sld [smem:[#allocation5 + %s164]]
    %s166 = sadd.s32 %s164, 1
    %s167 = sld [smem:[#allocation5 + %s166]]
    %s168 = smul.addr %s165, 16
    %s169 = scalar_lea.hbm %s1, %s168
    %s170 = scalar_lea.vmem [#allocation2], 2
    %s171 = scalar_lea.sflag [#allocation3], 2
    // Predicated region
    $region66: #{tpu_custom_call.1} parent=1 // pred_check
      _
    $region67: #{tpu_custom_call.1} parent=1 // pred_check_branch
      %173 = sbr.rel target = $region69
    $region68: #{tpu_custom_call.1} parent=1 // pred_region
      %174 = sst [smem:[#allocation19]] [#allocation28]
      %175 = sst [smem:[#allocation20]] [#allocation27]
    $region69: #{tpu_custom_call.1} parent=1 // pred_fallthru
      _
    %177 = shalt.err (0)
    %s179 = sshll.u32 %s170, 4
    %s180 = int_to_ptr.vmem [resolvable:$true] %s179
    %182 = dma.hbm_to_vmem [thread:$0]  %s169, 16, %s180, %s171
    %s183 = smul.addr %s167, 16
    %s184 = scalar_lea.hbm %s1, %s183
    %s185 = scalar_lea.vmem [#allocation2], 10
    %s186 = scalar_lea.sflag [#allocation3], 10
    // Predicated region
    $region70: #{tpu_custom_call.1} parent=1 // pred_check
      _
    $region71: #{tpu_custom_call.1} parent=1 // pred_check_branch
      %188 = sbr.rel target = $region73
    $region72: #{tpu_custom_call.1} parent=1 // pred_region
      %189 = sst [smem:[#allocation19]] [#allocation30]
      %190 = sst [smem:[#allocation20]] [#allocation29]
    $region73: #{tpu_custom_call.1} parent=1 // pred_fallthru
      _
    %192 = shalt.err (0)
    %s194 = sshll.u32 %s185, 4
    %s195 = int_to_ptr.vmem [resolvable:$true] %s194
    %197 = dma.hbm_to_vmem [thread:$0]  %s184, 16, %s195, %s186
    %s198 = sadd.s32 %s95, 3
    %s199 = smul.u32 %s198, 2
    %s200 = sld [smem:[#allocation5 + %s199]]
    %s201 = sadd.s32 %s199, 1
    %s202 = sld [smem:[#allocation5 + %s201]]
    %s203 = smul.addr %s200, 16
    %s204 = scalar_lea.hbm %s1, %s203
    %s205 = scalar_lea.vmem [#allocation2], 3
    %s206 = scalar_lea.sflag [#allocation3], 3
    // Predicated region
    $region74: #{tpu_custom_call.1} parent=1 // pred_check
      _
    $region75: #{tpu_custom_call.1} parent=1 // pred_check_branch
      %208 = sbr.rel target = $region77
    $region76: #{tpu_custom_call.1} parent=1 // pred_region
      %209 = sst [smem:[#allocation19]] [#allocation32]
      %210 = sst [smem:[#allocation20]] [#allocation31]
    $region77: #{tpu_custom_call.1} parent=1 // pred_fallthru
      _
    %212 = shalt.err (0)
    %s214 = sshll.u32 %s205, 4
    %s215 = int_to_ptr.vmem [resolvable:$true] %s214
    %217 = dma.hbm_to_vmem [thread:$0]  %s204, 16, %s215, %s206
    %s218 = smul.addr %s202, 16
    %s219 = scalar_lea.hbm %s1, %s218
    %s220 = scalar_lea.vmem [#allocation2], 11
    %s221 = scalar_lea.sflag [#allocation3], 11
    // Predicated region
    $region78: #{tpu_custom_call.1} parent=1 // pred_check
      _
    $region79: #{tpu_custom_call.1} parent=1 // pred_check_branch
      %223 = sbr.rel target = $region81
    $region80: #{tpu_custom_call.1} parent=1 // pred_region
      %224 = sst [smem:[#allocation19]] [#allocation34]
      %225 = sst [smem:[#allocation20]] [#allocation33]
    $region81: #{tpu_custom_call.1} parent=1 // pred_fallthru
      _
    %227 = shalt.err (0)
    %s229 = sshll.u32 %s220, 4
    %s230 = int_to_ptr.vmem [resolvable:$true] %s229
    %232 = dma.hbm_to_vmem [thread:$0]  %s219, 16, %s230, %s221
    %s233 = sadd.s32 %s95, 4
    %s234 = smul.u32 %s233, 2
    %s235 = sld [smem:[#allocation5 + %s234]]
    %s236 = sadd.s32 %s234, 1
    %s237 = sld [smem:[#allocation5 + %s236]]
    %s238 = smul.addr %s235, 16
    %s239 = scalar_lea.hbm %s1, %s238
    %s240 = scalar_lea.vmem [#allocation2], 4
    %s241 = scalar_lea.sflag [#allocation3], 4
    // Predicated region
    $region82: #{tpu_custom_call.1} parent=1 // pred_check
      _
    $region83: #{tpu_custom_call.1} parent=1 // pred_check_branch
      %243 = sbr.rel target = $region85
    $region84: #{tpu_custom_call.1} parent=1 // pred_region
      %244 = sst [smem:[#allocation19]] [#allocation36]
      %245 = sst [smem:[#allocation20]] [#allocation35]
    $region85: #{tpu_custom_call.1} parent=1 // pred_fallthru
      _
    %247 = shalt.err (0)
    %s249 = sshll.u32 %s240, 4
    %s250 = int_to_ptr.vmem [resolvable:$true] %s249
    %252 = dma.hbm_to_vmem [thread:$0]  %s239, 16, %s250, %s241
    %s253 = smul.addr %s237, 16
    %s254 = scalar_lea.hbm %s1, %s253
    %s255 = scalar_lea.vmem [#allocation2], 12
    %s256 = scalar_lea.sflag [#allocation3], 12
    // Predicated region
    $region86: #{tpu_custom_call.1} parent=1 // pred_check
      _
    $region87: #{tpu_custom_call.1} parent=1 // pred_check_branch
      %258 = sbr.rel target = $region89
    $region88: #{tpu_custom_call.1} parent=1 // pred_region
      %259 = sst [smem:[#allocation19]] [#allocation38]
      %260 = sst [smem:[#allocation20]] [#allocation37]
    $region89: #{tpu_custom_call.1} parent=1 // pred_fallthru
      _
    %262 = shalt.err (0)
    %s264 = sshll.u32 %s255, 4
    %s265 = int_to_ptr.vmem [resolvable:$true] %s264
    %267 = dma.hbm_to_vmem [thread:$0]  %s254, 16, %s265, %s256
    %s268 = sadd.s32 %s95, 5
    %s269 = smul.u32 %s268, 2
    %s270 = sld [smem:[#allocation5 + %s269]]
    %s271 = sadd.s32 %s269, 1
    %s272 = sld [smem:[#allocation5 + %s271]]
    %s273 = smul.addr %s270, 16
    %s274 = scalar_lea.hbm %s1, %s273
    %s275 = scalar_lea.vmem [#allocation2], 5
    %s276 = scalar_lea.sflag [#allocation3], 5
    // Predicated region
    $region90: #{tpu_custom_call.1} parent=1 // pred_check
      _
    $region91: #{tpu_custom_call.1} parent=1 // pred_check_branch
      %278 = sbr.rel target = $region93
    $region92: #{tpu_custom_call.1} parent=1 // pred_region
      %279 = sst [smem:[#allocation19]] [#allocation40]
      %280 = sst [smem:[#allocation20]] [#allocation39]
    $region93: #{tpu_custom_call.1} parent=1 // pred_fallthru
      _
    %282 = shalt.err (0)
    %s284 = sshll.u32 %s275, 4
    %s285 = int_to_ptr.vmem [resolvable:$true] %s284
    %287 = dma.hbm_to_vmem [thread:$0]  %s274, 16, %s285, %s276
    %s288 = smul.addr %s272, 16
    %s289 = scalar_lea.hbm %s1, %s288
    %s290 = scalar_lea.vmem [#allocation2], 13
    %s291 = scalar_lea.sflag [#allocation3], 13
    // Predicated region
    $region94: #{tpu_custom_call.1} parent=1 // pred_check
      _
    $region95: #{tpu_custom_call.1} parent=1 // pred_check_branch
      %293 = sbr.rel target = $region97
    $region96: #{tpu_custom_call.1} parent=1 // pred_region
      %294 = sst [smem:[#allocation19]] [#allocation42]
      %295 = sst [smem:[#allocation20]] [#allocation41]
    $region97: #{tpu_custom_call.1} parent=1 // pred_fallthru
      _
    %297 = shalt.err (0)
    %s299 = sshll.u32 %s290, 4
    %s300 = int_to_ptr.vmem [resolvable:$true] %s299
    %302 = dma.hbm_to_vmem [thread:$0]  %s289, 16, %s300, %s291
    %s303 = sadd.s32 %s95, 6
    %s304 = smul.u32 %s303, 2
    %s305 = sld [smem:[#allocation5 + %s304]]
    %s306 = sadd.s32 %s304, 1
    %s307 = sld [smem:[#allocation5 + %s306]]
    %s308 = smul.addr %s305, 16
    %s309 = scalar_lea.hbm %s1, %s308
    %s310 = scalar_lea.vmem [#allocation2], 6
    %s311 = scalar_lea.sflag [#allocation3], 6
    // Predicated region
    $region98: #{tpu_custom_call.1} parent=1 // pred_check
      _
    $region99: #{tpu_custom_call.1} parent=1 // pred_check_branch
      %313 = sbr.rel target = $region101
    $region100: #{tpu_custom_call.1} parent=1 // pred_region
      %314 = sst [smem:[#allocation19]] [#allocation44]
      %315 = sst [smem:[#allocation20]] [#allocation43]
    $region101: #{tpu_custom_call.1} parent=1 // pred_fallthru
      _
    %317 = shalt.err (0)
    %s319 = sshll.u32 %s310, 4
    %s320 = int_to_ptr.vmem [resolvable:$true] %s319
    %322 = dma.hbm_to_vmem [thread:$0]  %s309, 16, %s320, %s311
    %s323 = smul.addr %s307, 16
    %s324 = scalar_lea.hbm %s1, %s323
    %s325 = scalar_lea.vmem [#allocation2], 14
    %s326 = scalar_lea.sflag [#allocation3], 14
    // Predicated region
    $region102: #{tpu_custom_call.1} parent=1 // pred_check
      _
    $region103: #{tpu_custom_call.1} parent=1 // pred_check_branch
      %328 = sbr.rel target = $region105
    $region104: #{tpu_custom_call.1} parent=1 // pred_region
      %329 = sst [smem:[#allocation19]] [#allocation46]
      %330 = sst [smem:[#allocation20]] [#allocation45]
    $region105: #{tpu_custom_call.1} parent=1 // pred_fallthru
      _
    %332 = shalt.err (0)
    %s334 = sshll.u32 %s325, 4
    %s335 = int_to_ptr.vmem [resolvable:$true] %s334
    %337 = dma.hbm_to_vmem [thread:$0]  %s324, 16, %s335, %s326
    %s338 = sadd.s32 %s95, 7
    %s339 = smul.u32 %s338, 2
    %s340 = sld [smem:[#allocation5 + %s339]]
    %s341 = sadd.s32 %s339, 1
    %s342 = sld [smem:[#allocation5 + %s341]]
    %s343 = smul.addr %s340, 16
    %s344 = scalar_lea.hbm %s1, %s343
    %s345 = scalar_lea.vmem [#allocation2], 7
    %s346 = scalar_lea.sflag [#allocation3], 7
    // Predicated region
    $region106: #{tpu_custom_call.1} parent=1 // pred_check
      _
    $region107: #{tpu_custom_call.1} parent=1 // pred_check_branch
      %348 = sbr.rel target = $region109
    $region108: #{tpu_custom_call.1} parent=1 // pred_region
      %349 = sst [smem:[#allocation19]] [#allocation48]
      %350 = sst [smem:[#allocation20]] [#allocation47]
    $region109: #{tpu_custom_call.1} parent=1 // pred_fallthru
      _
    %352 = shalt.err (0)
    %s354 = sshll.u32 %s345, 4
    %s355 = int_to_ptr.vmem [resolvable:$true] %s354
    %357 = dma.hbm_to_vmem [thread:$0]  %s344, 16, %s355, %s346
    %s358 = smul.addr %s342, 16
    %s359 = scalar_lea.hbm %s1, %s358
    %s360 = scalar_lea.vmem [#allocation2], 15
    %s361 = scalar_lea.sflag [#allocation3], 15
    // Predicated region
    $region110: #{tpu_custom_call.1} parent=1 // pred_check
      _
    $region111: #{tpu_custom_call.1} parent=1 // pred_check_branch
      %363 = sbr.rel target = $region113
    $region112: #{tpu_custom_call.1} parent=1 // pred_region
      %364 = sst [smem:[#allocation19]] [#allocation50]
      %365 = sst [smem:[#allocation20]] [#allocation49]
    $region113: #{tpu_custom_call.1} parent=1 // pred_fallthru
      _
    %367 = shalt.err (0)
    %s369 = sshll.u32 %s360, 4
    %s370 = int_to_ptr.vmem [resolvable:$true] %s369
    %372 = dma.hbm_to_vmem [thread:$0]  %s359, 16, %s370, %s361
    %s373 = smul.u32 1, 1
    %s374 = sshll.u32 %s373, 4
    %375 = dma.done [#allocation3], %s374
    %s376 = sshll.u32 %s373, 4
    %377 = dma.done %s116, %s376
    %s378 = sshll.u32 %s373, 4
    %379 = dma.done %s136, %s378
    %s380 = sshll.u32 %s373, 4
    %381 = dma.done %s151, %s380
    %s382 = sshll.u32 %s373, 4
    %383 = dma.done %s171, %s382
    %s384 = sshll.u32 %s373, 4
    %385 = dma.done %s186, %s384
    %s386 = sshll.u32 %s373, 4
    %387 = dma.done %s206, %s386
    %s388 = sshll.u32 %s373, 4
    %389 = dma.done %s221, %s388
    %s390 = sshll.u32 %s373, 4
    %391 = dma.done %s241, %s390
    %s392 = sshll.u32 %s373, 4
    %393 = dma.done %s256, %s392
    %s394 = sshll.u32 %s373, 4
    %395 = dma.done %s276, %s394
    %s396 = sshll.u32 %s373, 4
    %397 = dma.done %s291, %s396
    %s398 = sshll.u32 %s373, 4
    %399 = dma.done %s311, %s398
    %s400 = sshll.u32 %s373, 4
    %401 = dma.done %s326, %s400
    %s402 = sshll.u32 %s373, 4
    %403 = dma.done %s346, %s402
    %s404 = sshll.u32 %s373, 4
    %405 = dma.done %s361, %s404
    %v406 = vld [vmem:[#allocation2] sm:$0xff]
    %v407 = vld [vmem:[#allocation2 + $0x8] sm:$0xff]
    %v408 = vpack.c.bf16 %v406, %v406
    %v409 = vpack.c.bf16 %v407, %v407
    %v410 = vld [vmem:[#allocation6] sm:$0xff]
    %v411 = vld [vmem:[#allocation6 + $0x8] sm:$0xff]
    %v412 = vld [vmem:[#allocation6 + $0x10] sm:$0xff]
    %v413 = vld [vmem:[#allocation6 + $0x18] sm:$0xff]
    %v414 = vld [vmem:[#allocation6 + $0x20] sm:$0xff]
    %v415 = vld [vmem:[#allocation6 + $0x28] sm:$0xff]
    %v416 = vld [vmem:[#allocation6 + $0x30] sm:$0xff]
    %v417 = vld [vmem:[#allocation6 + $0x38] sm:$0xff]
    %v418 = vld [vmem:[#allocation6 + $0x40] sm:$0xff]
    %v419 = vld [vmem:[#allocation6 + $0x48] sm:$0xff]
    %v420 = vld [vmem:[#allocation6 + $0x50] sm:$0xff]
    %v421 = vld [vmem:[#allocation6 + $0x58] sm:$0xff]
    %v422 = vld [vmem:[#allocation6 + $0x60] sm:$0xff]
    %v423 = vld [vmem:[#allocation6 + $0x68] sm:$0xff]
    %v424 = vld [vmem:[#allocation6 + $0x70] sm:$0xff]
    %v425 = vld [vmem:[#allocation6 + $0x78] sm:$0xff]
    %v426 = vld [vmem:[%s3] sm:$0xff]
    %v427 = vld [vmem:[#allocation9] sm:$0xf]
    %v428 = vld [vmem:[#allocation9 + $0x4] sm:$0xf]
    %v429 = vld [vmem:[#allocation9 + $0x8] sm:$0xf]
    %v430 = vld [vmem:[#allocation9 + $0xc] sm:$0xf]
    %v431 = vld [vmem:[#allocation9 + $0x10] sm:$0xf]
    %v432 = vld [vmem:[#allocation9 + $0x14] sm:$0xf]
    %v433 = vld [vmem:[#allocation9 + $0x18] sm:$0xf]
    %v434 = vld [vmem:[#allocation9 + $0x1c] sm:$0xf]
    %v435 = vld [vmem:[#allocation9 + $0x20] sm:$0xf]
    %v436 = vld [vmem:[#allocation9 + $0x24] sm:$0xf]
    %v437 = vld [vmem:[#allocation9 + $0x28] sm:$0xf]
    %v438 = vld [vmem:[#allocation9 + $0x2c] sm:$0xf]
    %v439 = vld [vmem:[#allocation9 + $0x30] sm:$0xf]
    %v440 = vld [vmem:[#allocation9 + $0x34] sm:$0xf]
    %v441 = vld [vmem:[#allocation9 + $0x38] sm:$0xf]
    %v442 = vld [vmem:[#allocation9 + $0x3c] sm:$0xf]
    %v443 = vld [vmem:[#allocation9 + $0x40] sm:$0xf]
    %v444 = vld [vmem:[#allocation9 + $0x44] sm:$0xf]
    %v445 = vld [vmem:[#allocation9 + $0x48] sm:$0xf]
    %v446 = vld [vmem:[#allocation9 + $0x4c] sm:$0xf]
    %v447 = vld [vmem:[#allocation9 + $0x50] sm:$0xf]
    %v448 = vld [vmem:[#allocation9 + $0x54] sm:$0xf]
    %v449 = vld [vmem:[#allocation9 + $0x58] sm:$0xf]
    %v450 = vld [vmem:[#allocation9 + $0x5c] sm:$0xf]
    %v451 = vld [vmem:[#allocation9 + $0x60] sm:$0xf]
    %v452 = vld [vmem:[#allocation9 + $0x64] sm:$0xf]
    %v453 = vld [vmem:[#allocation9 + $0x68] sm:$0xf]
    %v454 = vld [vmem:[#allocation9 + $0x6c] sm:$0xf]
    %v455 = vld [vmem:[#allocation9 + $0x70] sm:$0xf]
    %v456 = vld [vmem:[#allocation9 + $0x74] sm:$0xf]
    %v457 = vld [vmem:[#allocation9 + $0x78] sm:$0xf]
    %v458 = vld [vmem:[#allocation9 + $0x7c] sm:$0xf]
    %v459 = vld [vmem:[#allocation9 + $0x80] sm:$0xf]
    %v460 = vld [vmem:[#allocation9 + $0x84] sm:$0xf]
    %v461 = vld [vmem:[#allocation9 + $0x88] sm:$0xf]
    %v462 = vld [vmem:[#allocation9 + $0x8c] sm:$0xf]
    %v463 = vld [vmem:[#allocation9 + $0x90] sm:$0xf]
    %v464 = vld [vmem:[#allocation9 + $0x94] sm:$0xf]
    %v465 = vld [vmem:[#allocation9 + $0x98] sm:$0xf]
    %v466 = vld [vmem:[#allocation9 + $0x9c] sm:$0xf]
    %v467 = vld [vmem:[#allocation9 + $0xa0] sm:$0xf]
    %v468 = vld [vmem:[#allocation9 + $0xa4] sm:$0xf]
    %v469 = vld [vmem:[#allocation9 + $0xa8] sm:$0xf]
    %v470 = vld [vmem:[#allocation9 + $0xac] sm:$0xf]
    %v471 = vld [vmem:[#allocation9 + $0xb0] sm:$0xf]
    %v472 = vld [vmem:[#allocation9 + $0xb4] sm:$0xf]
    %v473 = vld [vmem:[#allocation9 + $0xb8] sm:$0xf]
    %v474 = vld [vmem:[#allocation9 + $0xbc] sm:$0xf]
    %v475 = vld [vmem:[#allocation9 + $0xc0] sm:$0xf]
    %v476 = vld [vmem:[#allocation9 + $0xc4] sm:$0xf]
    %v477 = vld [vmem:[#allocation9 + $0xc8] sm:$0xf]
    %v478 = vld [vmem:[#allocation9 + $0xcc] sm:$0xf]
    %v479 = vld [vmem:[#allocation9 + $0xd0] sm:$0xf]
    %v480 = vld [vmem:[#allocation9 + $0xd4] sm:$0xf]
    %v481 = vld [vmem:[#allocation9 + $0xd8] sm:$0xf]
    %v482 = vld [vmem:[#allocation9 + $0xdc] sm:$0xf]
    %v483 = vld [vmem:[#allocation9 + $0xe0] sm:$0xf]
    %v484 = vld [vmem:[#allocation9 + $0xe4] sm:$0xf]
    %v485 = vld [vmem:[#allocation9 + $0xe8] sm:$0xf]
    %v486 = vld [vmem:[#allocation9 + $0xec] sm:$0xf]
    %v487 = vld [vmem:[#allocation9 + $0xf0] sm:$0xf]
    %v488 = vld [vmem:[#allocation9 + $0xf4] sm:$0xf]
    %v489 = vld [vmem:[#allocation9 + $0xf8] sm:$0xf]
    %v490 = vld [vmem:[#allocation9 + $0xfc] sm:$0xf]
    %v491 = vld [vmem:[#allocation9 + $0x100] sm:$0xf]
    %v492 = vld [vmem:[#allocation9 + $0x104] sm:$0xf]
    %v493 = vld [vmem:[#allocation9 + $0x108] sm:$0xf]
    %v494 = vld [vmem:[#allocation9 + $0x10c] sm:$0xf]
    %v495 = vld [vmem:[#allocation9 + $0x110] sm:$0xf]
    %v496 = vld [vmem:[#allocation9 + $0x114] sm:$0xf]
    %v497 = vld [vmem:[#allocation9 + $0x118] sm:$0xf]
    %v498 = vld [vmem:[#allocation9 + $0x11c] sm:$0xf]
    %v499 = vld [vmem:[#allocation9 + $0x120] sm:$0xf]
    %v500 = vld [vmem:[#allocation9 + $0x124] sm:$0xf]
    %v501 = vld [vmem:[#allocation9 + $0x128] sm:$0xf]
    %v502 = vld [vmem:[#allocation9 + $0x12c] sm:$0xf]
    %v503 = vld [vmem:[#allocation9 + $0x130] sm:$0xf]
    %v504 = vld [vmem:[#allocation9 + $0x134] sm:$0xf]
    %v505 = vld [vmem:[#allocation9 + $0x138] sm:$0xf]
    %v506 = vld [vmem:[#allocation9 + $0x13c] sm:$0xf]
    %v507 = vld [vmem:[#allocation9 + $0x140] sm:$0xf]
    %v508 = vld [vmem:[#allocation9 + $0x144] sm:$0xf]
    %v509 = vld [vmem:[#allocation9 + $0x148] sm:$0xf]
    %v510 = vld [vmem:[#allocation9 + $0x14c] sm:$0xf]
    %v511 = vld [vmem:[#allocation9 + $0x150] sm:$0xf]
    %v512 = vld [vmem:[#allocation9 + $0x154] sm:$0xf]
    %v513 = vld [vmem:[#allocation9 + $0x158] sm:$0xf]
    %v514 = vld [vmem:[#allocation9 + $0x15c] sm:$0xf]
    %v515 = vld [vmem:[#allocation9 + $0x160] sm:$0xf]
    %v516 = vld [vmem:[#allocation9 + $0x164] sm:$0xf]
    %v517 = vld [vmem:[#allocation9 + $0x168] sm:$0xf]
    %v518 = vld [vmem:[#allocation9 + $0x16c] sm:$0xf]
    %v519 = vld [vmem:[#allocation9 + $0x170] sm:$0xf]
    %v520 = vld [vmem:[#allocation9 + $0x174] sm:$0xf]
    %v521 = vld [vmem:[#allocation9 + $0x178] sm:$0xf]
    %v522 = vld [vmem:[#allocation9 + $0x17c] sm:$0xf]
    %v523 = vld [vmem:[#allocation9 + $0x180] sm:$0xf]
    %v524 = vld [vmem:[#allocation9 + $0x184] sm:$0xf]
    %v525 = vld [vmem:[#allocation9 + $0x188] sm:$0xf]
    %v526 = vld [vmem:[#allocation9 + $0x18c] sm:$0xf]
    %v527 = vld [vmem:[#allocation9 + $0x190] sm:$0xf]
    %v528 = vld [vmem:[#allocation9 + $0x194] sm:$0xf]
    %v529 = vld [vmem:[#allocation9 + $0x198] sm:$0xf]
    %v530 = vld [vmem:[#allocation9 + $0x19c] sm:$0xf]
    %v531 = vld [vmem:[#allocation9 + $0x1a0] sm:$0xf]
    %v532 = vld [vmem:[#allocation9 + $0x1a4] sm:$0xf]
    %v533 = vld [vmem:[#allocation9 + $0x1a8] sm:$0xf]
    %v534 = vld [vmem:[#allocation9 + $0x1ac] sm:$0xf]
    %v535 = vld [vmem:[#allocation9 + $0x1b0] sm:$0xf]
    %v536 = vld [vmem:[#allocation9 + $0x1b4] sm:$0xf]
    %v537 = vld [vmem:[#allocation9 + $0x1b8] sm:$0xf]
    %v538 = vld [vmem:[#allocation9 + $0x1bc] sm:$0xf]
    %v539 = vld [vmem:[#allocation9 + $0x1c0] sm:$0xf]
    %v540 = vld [vmem:[#allocation9 + $0x1c4] sm:$0xf]
    %v541 = vld [vmem:[#allocation9 + $0x1c8] sm:$0xf]
    %v542 = vld [vmem:[#allocation9 + $0x1cc] sm:$0xf]
    %v543 = vld [vmem:[#allocation9 + $0x1d0] sm:$0xf]
    %v544 = vld [vmem:[#allocation9 + $0x1d4] sm:$0xf]
    %v545 = vld [vmem:[#allocation9 + $0x1d8] sm:$0xf]
    %v546 = vld [vmem:[#allocation9 + $0x1dc] sm:$0xf]
    %v547 = vld [vmem:[#allocation9 + $0x1e0] sm:$0xf]
    %v548 = vld [vmem:[#allocation9 + $0x1e4] sm:$0xf]
    %v549 = vld [vmem:[#allocation9 + $0x1e8] sm:$0xf]
    %v550 = vld [vmem:[#allocation9 + $0x1ec] sm:$0xf]
    %v551 = vld [vmem:[#allocation9 + $0x1f0] sm:$0xf]
    %v552 = vld [vmem:[#allocation9 + $0x1f4] sm:$0xf]
    %v553 = vld [vmem:[#allocation9 + $0x1f8] sm:$0xf]
    %v554 = vld [vmem:[#allocation9 + $0x1fc] sm:$0xf]
    %v555 = vld [vmem:[%s5] sm:$0x1]
    %v557 = vlaneseq
    %v558 = vshrl.u32 %v557, 7
    %v559 = vsub.s32 0, %v558
    %v560 = vrot.slane %v426, %v559
    %v561 = vlaneseq
    %v562 = vshrl.u32 %v561, 7
    %v563 = vsub.s32 1, %v562
    %v564 = vrot.slane %v426, %v563
    %v565 = vlaneseq
    %v566 = vshrl.u32 %v565, 7
    %v567 = vsub.s32 2, %v566
    %v568 = vrot.slane %v426, %v567
    %v569 = vlaneseq
    %v570 = vshrl.u32 %v569, 7
    %v571 = vsub.s32 3, %v570
    %v572 = vrot.slane %v426, %v571
    %v573 = vlaneseq
    %v574 = vshrl.u32 %v573, 7
    %v575 = vsub.s32 4, %v574
    %v576 = vrot.slane %v426, %v575
    %v577 = vlaneseq
    %v578 = vshrl.u32 %v577, 7
    %v579 = vsub.s32 5, %v578
    %v580 = vrot.slane %v426, %v579
    %v581 = vlaneseq
    %v582 = vshrl.u32 %v581, 7
    %v583 = vsub.s32 6, %v582
    %v584 = vrot.slane %v426, %v583
    %v585 = vlaneseq
    %v586 = vshrl.u32 %v585, 7
    %v587 = vsub.s32 7, %v586
    %v588 = vrot.slane %v426, %v587
    %v613 = vunpack.c.l.b16 %v410
    %v614 = vunpack.c.h.b16 %v410
    %v615 = vunpack.c.l.b16 %v411
    %v616 = vunpack.c.h.b16 %v411
    %v617 = vunpack.c.l.b16 %v412
    %v618 = vunpack.c.h.b16 %v412
    %v619 = vunpack.c.l.b16 %v413
    %v620 = vunpack.c.h.b16 %v413
    %v621 = vunpack.c.l.b16 %v414
    %v622 = vunpack.c.h.b16 %v414
    %v623 = vunpack.c.l.b16 %v415
    %v624 = vunpack.c.h.b16 %v415
    %v625 = vunpack.c.l.b16 %v416
    %v626 = vunpack.c.h.b16 %v416
    %v627 = vunpack.c.l.b16 %v417
    %v628 = vunpack.c.h.b16 %v417
    %v629 = vunpack.c.l.b16 %v418
    %v630 = vunpack.c.h.b16 %v418
    %v631 = vunpack.c.l.b16 %v419
    %v632 = vunpack.c.h.b16 %v419
    %v633 = vunpack.c.l.b16 %v420
    %v634 = vunpack.c.h.b16 %v420
    %v635 = vunpack.c.l.b16 %v421
    %v636 = vunpack.c.h.b16 %v421
    %v637 = vunpack.c.l.b16 %v422
    %v638 = vunpack.c.h.b16 %v422
    %v639 = vunpack.c.l.b16 %v423
    %v640 = vunpack.c.h.b16 %v423
    %v641 = vunpack.c.l.b16 %v424
    %v642 = vunpack.c.h.b16 %v424
    %v643 = vunpack.c.l.b16 %v425
    %v644 = vunpack.c.h.b16 %v425
    %v645 = vpack.c.b16 %v621, %v613
    %v646 = vpack.c.b16 %v622, %v614
    %v647 = vpack.c.b16 %v623, %v615
    %v648 = vpack.c.b16 %v624, %v616
    %v649 = vpack.c.b16 %v625, %v617
    %v650 = vpack.c.b16 %v626, %v618
    %v651 = vpack.c.b16 %v627, %v619
    %v652 = vpack.c.b16 %v628, %v620
    %v653 = vpack.c.b16 %v637, %v629
    %v654 = vpack.c.b16 %v638, %v630
    %v655 = vpack.c.b16 %v639, %v631
    %v656 = vpack.c.b16 %v640, %v632
    %v657 = vpack.c.b16 %v641, %v633
    %v658 = vpack.c.b16 %v642, %v634
    %v659 = vpack.c.b16 %v643, %v635
    %v660 = vpack.c.b16 %v644, %v636
    %vm677 = vcmask 261120
    %v679 = vsel %vm677, %v408, 0
    %681 = vmatprep.subr.bf16.mxu0 %v646
    %682 = vmatpush1.bf16.msra.mxu0 %v645
    %683 = vmatprep.subr.bf16.mxu0 %v654
    %684 = vmatpush1.bf16.msra.mxu0 %v653
    %685 = vmatprep.subr.bf16.mxu0 0
    %686 = vmatpush1.bf16.msra.mxu0 0
    %687 = vmatprep.subr.bf16.mxu0 0
    %688 = vmatpush1.bf16.msra.mxu0 0
    %689 = vmatprep.subr.bf16.mxu0 0
    %690 = vmatpush1.bf16.msra.mxu0 0
    %691 = vmatprep.subr.bf16.mxu0 0
    %692 = vmatpush1.bf16.msra.mxu0 0
    %693 = vmatprep.subr.bf16.mxu0 0
    %694 = vmatpush1.bf16.msra.mxu0 0
    %695 = vmatprep.subr.bf16.mxu0 0
    %696 = vmatpush1.bf16.msra.mxu0 0
    %697 = vmatprep.subr.bf16.mxu0 0
    %698 = vmatpush1.bf16.msra.mxu0 0
    %699 = vmatprep.subr.bf16.mxu0 0
    %700 = vmatpush1.bf16.msra.mxu0 0
    %701 = vmatprep.subr.bf16.mxu0 0
    %702 = vmatpush1.bf16.msra.mxu0 0
    %703 = vmatprep.subr.bf16.mxu0 0
    %704 = vmatpush1.bf16.msra.mxu0 0
    %705 = vmatprep.subr.bf16.mxu0 0
    %706 = vmatpush1.bf16.msra.mxu0 0
    %707 = vmatprep.subr.bf16.mxu0 0
    %708 = vmatpush1.bf16.msra.mxu0 0
    %709 = vmatprep.subr.bf16.mxu0 0
    %710 = vmatpush1.bf16.msra.mxu0 0
    %711 = vmatprep.subr.bf16.mxu0 0
    %712 = vmatpush1.bf16.msra.mxu0 0
    %713 = vmatprep.mubr.bf16.mxu0 0
    %714 = vmatmul.mubr.bf16.gmra.mrb[0].mxu0 %v679
    %v715 = vpop.f32.mrb[0].mxu0
    %v716 = vadd.f32 %v560, %v715
    %v717 = vpop.f32.mrb[0].mxu0
    %v718 = vadd.f32 %v564, %v717
    %v719 = vpop.f32.mrb[0].mxu0
    %v720 = vpop.f32.mrb[0].mxu0
    %721 = vdwg.mxu0
    %722 = vmatprep.subr.bf16.mxu0 %v648
    %723 = vmatpush1.bf16.msra.mxu0 %v647
    %724 = vmatprep.subr.bf16.mxu0 %v656
    %725 = vmatpush1.bf16.msra.mxu0 %v655
    %726 = vmatprep.subr.bf16.mxu0 0
    %727 = vmatpush1.bf16.msra.mxu0 0
    %728 = vmatprep.subr.bf16.mxu0 0
    %729 = vmatpush1.bf16.msra.mxu0 0
    %730 = vmatprep.subr.bf16.mxu0 0
    %731 = vmatpush1.bf16.msra.mxu0 0
    %732 = vmatprep.subr.bf16.mxu0 0
    %733 = vmatpush1.bf16.msra.mxu0 0
    %734 = vmatprep.subr.bf16.mxu0 0
    %735 = vmatpush1.bf16.msra.mxu0 0
    %736 = vmatprep.subr.bf16.mxu0 0
    %737 = vmatpush1.bf16.msra.mxu0 0
    %738 = vmatprep.subr.bf16.mxu0 0
    %739 = vmatpush1.bf16.msra.mxu0 0
    %740 = vmatprep.subr.bf16.mxu0 0
    %741 = vmatpush1.bf16.msra.mxu0 0
    %742 = vmatprep.subr.bf16.mxu0 0
    %743 = vmatpush1.bf16.msra.mxu0 0
    %744 = vmatprep.subr.bf16.mxu0 0
    %745 = vmatpush1.bf16.msra.mxu0 0
    %746 = vmatprep.subr.bf16.mxu0 0
    %747 = vmatpush1.bf16.msra.mxu0 0
    %748 = vmatprep.subr.bf16.mxu0 0
    %749 = vmatpush1.bf16.msra.mxu0 0
    %750 = vmatprep.subr.bf16.mxu0 0
    %751 = vmatpush1.bf16.msra.mxu0 0
    %752 = vmatprep.subr.bf16.mxu0 0
    %753 = vmatpush1.bf16.msra.mxu0 0
    %754 = vmatprep.mubr.bf16.mxu0 0
    %755 = vmatmul.mubr.bf16.gmra.mrb[0].mxu0 %v679
    %v756 = vpop.f32.mrb[0].mxu0
    %v757 = vadd.f32 %v568, %v756
    %v758 = vpop.f32.mrb[0].mxu0
    %v759 = vadd.f32 %v572, %v758
    %v760 = vpop.f32.mrb[0].mxu0
    %v761 = vpop.f32.mrb[0].mxu0
    %762 = vdwg.mxu0
    %763 = vmatprep.subr.bf16.mxu0 %v650
    %764 = vmatpush1.bf16.msra.mxu0 %v649
    %765 = vmatprep.subr.bf16.mxu0 %v658
    %766 = vmatpush1.bf16.msra.mxu0 %v657
    %767 = vmatprep.subr.bf16.mxu0 0
    %768 = vmatpush1.bf16.msra.mxu0 0
    %769 = vmatprep.subr.bf16.mxu0 0
    %770 = vmatpush1.bf16.msra.mxu0 0
    %771 = vmatprep.subr.bf16.mxu0 0
    %772 = vmatpush1.bf16.msra.mxu0 0
    %773 = vmatprep.subr.bf16.mxu0 0
    %774 = vmatpush1.bf16.msra.mxu0 0
    %775 = vmatprep.subr.bf16.mxu0 0
    %776 = vmatpush1.bf16.msra.mxu0 0
    %777 = vmatprep.subr.bf16.mxu0 0
    %778 = vmatpush1.bf16.msra.mxu0 0
    %779 = vmatprep.subr.bf16.mxu0 0
    %780 = vmatpush1.bf16.msra.mxu0 0
    %781 = vmatprep.subr.bf16.mxu0 0
    %782 = vmatpush1.bf16.msra.mxu0 0
    %783 = vmatprep.subr.bf16.mxu0 0
    %784 = vmatpush1.bf16.msra.mxu0 0
    %785 = vmatprep.subr.bf16.mxu0 0
    %786 = vmatpush1.bf16.msra.mxu0 0
    %787 = vmatprep.subr.bf16.mxu0 0
    %788 = vmatpush1.bf16.msra.mxu0 0
    %789 = vmatprep.subr.bf16.mxu0 0
    %790 = vmatpush1.bf16.msra.mxu0 0
    %791 = vmatprep.subr.bf16.mxu0 0
    %792 = vmatpush1.bf16.msra.mxu0 0
    %793 = vmatprep.subr.bf16.mxu0 0
    %794 = vmatpush1.bf16.msra.mxu0 0
    %795 = vmatprep.mubr.bf16.mxu0 0
    %796 = vmatmul.mubr.bf16.gmra.mrb[0].mxu0 %v679
    %v797 = vpop.f32.mrb[0].mxu0
    %v798 = vadd.f32 %v576, %v797
    %v799 = vpop.f32.mrb[0].mxu0
    %v800 = vadd.f32 %v580, %v799
    %v801 = vpop.f32.mrb[0].mxu0
    %v802 = vpop.f32.mrb[0].mxu0
    %803 = vdwg.mxu0
    %804 = vmatprep.subr.bf16.mxu0 %v652
    %805 = vmatpush1.bf16.msra.mxu0 %v651
    %806 = vmatprep.subr.bf16.mxu0 %v660
    %807 = vmatpush1.bf16.msra.mxu0 %v659
    %808 = vmatprep.subr.bf16.mxu0 0
    %809 = vmatpush1.bf16.msra.mxu0 0
    %810 = vmatprep.subr.bf16.mxu0 0
    %811 = vmatpush1.bf16.msra.mxu0 0
    %812 = vmatprep.subr.bf16.mxu0 0
    %813 = vmatpush1.bf16.msra.mxu0 0
    %814 = vmatprep.subr.bf16.mxu0 0
    %815 = vmatpush1.bf16.msra.mxu0 0
    %816 = vmatprep.subr.bf16.mxu0 0
    %817 = vmatpush1.bf16.msra.mxu0 0
    %818 = vmatprep.subr.bf16.mxu0 0
    %819 = vmatpush1.bf16.msra.mxu0 0
    %820 = vmatprep.subr.bf16.mxu0 0
    %821 = vmatpush1.bf16.msra.mxu0 0
    %822 = vmatprep.subr.bf16.mxu0 0
    %823 = vmatpush1.bf16.msra.mxu0 0
    %824 = vmatprep.subr.bf16.mxu0 0
    %825 = vmatpush1.bf16.msra.mxu0 0
    %826 = vmatprep.subr.bf16.mxu0 0
    %827 = vmatpush1.bf16.msra.mxu0 0
    %828 = vmatprep.subr.bf16.mxu0 0
    %829 = vmatpush1.bf16.msra.mxu0 0
    %830 = vmatprep.subr.bf16.mxu0 0
    %831 = vmatpush1.bf16.msra.mxu0 0
    %832 = vmatprep.subr.bf16.mxu0 0
    %833 = vmatpush1.bf16.msra.mxu0 0
    %834 = vmatprep.subr.bf16.mxu0 0
    %835 = vmatpush1.bf16.msra.mxu0 0
    %836 = vmatprep.mubr.bf16.mxu0 0
    %837 = vmatmul.mubr.bf16.gmra.mrb[0].mxu0 %v679
    %v838 = vpop.f32.mrb[0].mxu0
    %v839 = vadd.f32 %v584, %v838
    %v840 = vpop.f32.mrb[0].mxu0
    %v841 = vadd.f32 %v588, %v840
    %v842 = vpop.f32.mrb[0].mxu0
    %v843 = vpop.f32.mrb[0].mxu0
    %844 = vdwg.mxu0
    %v845 = vmax.f32 %v716, 0.0
    %v846 = vmax.f32 %v718, 0.0
    %v847 = vmax.f32 %v757, 0.0
    %v848 = vmax.f32 %v759, 0.0
    %v849 = vmax.f32 %v798, 0.0
    %v850 = vmax.f32 %v800, 0.0
    %v851 = vmax.f32 %v839, 0.0
    %v852 = vmax.f32 %v841, 0.0
    %v853 = vpack.c.bf16 %v845, %v845
    %v854 = vpack.c.bf16 %v846, %v846
    %v855 = vpack.c.bf16 %v847, %v847
    %v856 = vpack.c.bf16 %v848, %v848
    %v857 = vpack.c.bf16 %v849, %v849
    %v858 = vpack.c.bf16 %v850, %v850
    %v859 = vpack.c.bf16 %v851, %v851
    %v860 = vpack.c.bf16 %v852, %v852
    %v862 = vlaneseq
    %v863 = vshrl.u32 %v862, 7
    %v864 = vsub.s32 0, %v863
    %v865 = vrot.slane %v555, %v864
    %v995 = vunpack.c.l.b16 %v427
    %v996 = vunpack.c.l.b16 %v428
    %v997 = vunpack.c.l.b16 %v429
    %v998 = vunpack.c.l.b16 %v430
    %v999 = vunpack.c.l.b16 %v431
    %v1000 = vunpack.c.l.b16 %v432
    %v1001 = vunpack.c.l.b16 %v433
    %v1002 = vunpack.c.l.b16 %v434
    %v1003 = vunpack.c.l.b16 %v435
    %v1004 = vunpack.c.l.b16 %v436
    %v1005 = vunpack.c.l.b16 %v437
    %v1006 = vunpack.c.l.b16 %v438
    %v1007 = vunpack.c.l.b16 %v439
    %v1008 = vunpack.c.l.b16 %v440
    %v1009 = vunpack.c.l.b16 %v441
    %v1010 = vunpack.c.l.b16 %v442
    %v1011 = vunpack.c.l.b16 %v443
    %v1012 = vunpack.c.l.b16 %v444
    %v1013 = vunpack.c.l.b16 %v445
    %v1014 = vunpack.c.l.b16 %v446
    %v1015 = vunpack.c.l.b16 %v447
    %v1016 = vunpack.c.l.b16 %v448
    %v1017 = vunpack.c.l.b16 %v449
    %v1018 = vunpack.c.l.b16 %v450
    %v1019 = vunpack.c.l.b16 %v451
    %v1020 = vunpack.c.l.b16 %v452
    %v1021 = vunpack.c.l.b16 %v453
    %v1022 = vunpack.c.l.b16 %v454
    %v1023 = vunpack.c.l.b16 %v455
    %v1024 = vunpack.c.l.b16 %v456
    %v1025 = vunpack.c.l.b16 %v457
    %v1026 = vunpack.c.l.b16 %v458
    %v1027 = vunpack.c.l.b16 %v459
    %v1028 = vunpack.c.l.b16 %v460
    %v1029 = vunpack.c.l.b16 %v461
    %v1030 = vunpack.c.l.b16 %v462
    %v1031 = vunpack.c.l.b16 %v463
    %v1032 = vunpack.c.l.b16 %v464
    %v1033 = vunpack.c.l.b16 %v465
    %v1034 = vunpack.c.l.b16 %v466
    %v1035 = vunpack.c.l.b16 %v467
    %v1036 = vunpack.c.l.b16 %v468
    %v1037 = vunpack.c.l.b16 %v469
    %v1038 = vunpack.c.l.b16 %v470
    %v1039 = vunpack.c.l.b16 %v471
    %v1040 = vunpack.c.l.b16 %v472
    %v1041 = vunpack.c.l.b16 %v473
    %v1042 = vunpack.c.l.b16 %v474
    %v1043 = vunpack.c.l.b16 %v475
    %v1044 = vunpack.c.l.b16 %v476
    %v1045 = vunpack.c.l.b16 %v477
    %v1046 = vunpack.c.l.b16 %v478
    %v1047 = vunpack.c.l.b16 %v479
    %v1048 = vunpack.c.l.b16 %v480
    %v1049 = vunpack.c.l.b16 %v481
    %v1050 = vunpack.c.l.b16 %v482
    %v1051 = vunpack.c.l.b16 %v483
    %v1052 = vunpack.c.l.b16 %v484
    %v1053 = vunpack.c.l.b16 %v485
    %v1054 = vunpack.c.l.b16 %v486
    %v1055 = vunpack.c.l.b16 %v487
    %v1056 = vunpack.c.l.b16 %v488
    %v1057 = vunpack.c.l.b16 %v489
    %v1058 = vunpack.c.l.b16 %v490
    %v1059 = vunpack.c.l.b16 %v491
    %v1060 = vunpack.c.l.b16 %v492
    %v1061 = vunpack.c.l.b16 %v493
    %v1062 = vunpack.c.l.b16 %v494
    %v1063 = vunpack.c.l.b16 %v495
    %v1064 = vunpack.c.l.b16 %v496
    %v1065 = vunpack.c.l.b16 %v497
    %v1066 = vunpack.c.l.b16 %v498
    %v1067 = vunpack.c.l.b16 %v499
    %v1068 = vunpack.c.l.b16 %v500
    %v1069 = vunpack.c.l.b16 %v501
    %v1070 = vunpack.c.l.b16 %v502
    %v1071 = vunpack.c.l.b16 %v503
    %v1072 = vunpack.c.l.b16 %v504
    %v1073 = vunpack.c.l.b16 %v505
    %v1074 = vunpack.c.l.b16 %v506
    %v1075 = vunpack.c.l.b16 %v507
    %v1076 = vunpack.c.l.b16 %v508
    %v1077 = vunpack.c.l.b16 %v509
    %v1078 = vunpack.c.l.b16 %v510
    %v1079 = vunpack.c.l.b16 %v511
    %v1080 = vunpack.c.l.b16 %v512
    %v1081 = vunpack.c.l.b16 %v513
    %v1082 = vunpack.c.l.b16 %v514
    %v1083 = vunpack.c.l.b16 %v515
    %v1084 = vunpack.c.l.b16 %v516
    %v1085 = vunpack.c.l.b16 %v517
    %v1086 = vunpack.c.l.b16 %v518
    %v1087 = vunpack.c.l.b16 %v519
    %v1088 = vunpack.c.l.b16 %v520
    %v1089 = vunpack.c.l.b16 %v521
    %v1090 = vunpack.c.l.b16 %v522
    %v1091 = vunpack.c.l.b16 %v523
    %v1092 = vunpack.c.l.b16 %v524
    %v1093 = vunpack.c.l.b16 %v525
    %v1094 = vunpack.c.l.b16 %v526
    %v1095 = vunpack.c.l.b16 %v527
    %v1096 = vunpack.c.l.b16 %v528
    %v1097 = vunpack.c.l.b16 %v529
    %v1098 = vunpack.c.l.b16 %v530
    %v1099 = vunpack.c.l.b16 %v531
    %v1100 = vunpack.c.l.b16 %v532
    %v1101 = vunpack.c.l.b16 %v533
    %v1102 = vunpack.c.l.b16 %v534
    %v1103 = vunpack.c.l.b16 %v535
    %v1104 = vunpack.c.l.b16 %v536
    %v1105 = vunpack.c.l.b16 %v537
    %v1106 = vunpack.c.l.b16 %v538
    %v1107 = vunpack.c.l.b16 %v539
    %v1108 = vunpack.c.l.b16 %v540
    %v1109 = vunpack.c.l.b16 %v541
    %v1110 = vunpack.c.l.b16 %v542
    %v1111 = vunpack.c.l.b16 %v543
    %v1112 = vunpack.c.l.b16 %v544
    %v1113 = vunpack.c.l.b16 %v545
    %v1114 = vunpack.c.l.b16 %v546
    %v1115 = vunpack.c.l.b16 %v547
    %v1116 = vunpack.c.l.b16 %v548
    %v1117 = vunpack.c.l.b16 %v549
    %v1118 = vunpack.c.l.b16 %v550
    %v1119 = vunpack.c.l.b16 %v551
    %v1120 = vunpack.c.l.b16 %v552
    %v1121 = vunpack.c.l.b16 %v553
    %v1122 = vunpack.c.l.b16 %v554
    %v1123 = vpack.c.b16 %v996, %v995
    %v1124 = vpack.c.b16 %v998, %v997
    %v1125 = vpack.c.b16 %v1000, %v999
    %v1126 = vpack.c.b16 %v1002, %v1001
    %v1127 = vpack.c.b16 %v1004, %v1003
    %v1128 = vpack.c.b16 %v1006, %v1005
    %v1129 = vpack.c.b16 %v1008, %v1007
    %v1130 = vpack.c.b16 %v1010, %v1009
    %v1131 = vpack.c.b16 %v1012, %v1011
    %v1132 = vpack.c.b16 %v1014, %v1013
    %v1133 = vpack.c.b16 %v1016, %v1015
    %v1134 = vpack.c.b16 %v1018, %v1017
    %v1135 = vpack.c.b16 %v1020, %v1019
    %v1136 = vpack.c.b16 %v1022, %v1021
    %v1137 = vpack.c.b16 %v1024, %v1023
    %v1138 = vpack.c.b16 %v1026, %v1025
    %v1139 = vpack.c.b16 %v1028, %v1027
    %v1140 = vpack.c.b16 %v1030, %v1029
    %v1141 = vpack.c.b16 %v1032, %v1031
    %v1142 = vpack.c.b16 %v1034, %v1033
    %v1143 = vpack.c.b16 %v1036, %v1035
    %v1144 = vpack.c.b16 %v1038, %v1037
    %v1145 = vpack.c.b16 %v1040, %v1039
    %v1146 = vpack.c.b16 %v1042, %v1041
    %v1147 = vpack.c.b16 %v1044, %v1043
    %v1148 = vpack.c.b16 %v1046, %v1045
    %v1149 = vpack.c.b16 %v1048, %v1047
    %v1150 = vpack.c.b16 %v1050, %v1049
    %v1151 = vpack.c.b16 %v1052, %v1051
    %v1152 = vpack.c.b16 %v1054, %v1053
    %v1153 = vpack.c.b16 %v1056, %v1055
    %v1154 = vpack.c.b16 %v1058, %v1057
    %v1155 = vpack.c.b16 %v1060, %v1059
    %v1156 = vpack.c.b16 %v1062, %v1061
    %v1157 = vpack.c.b16 %v1064, %v1063
    %v1158 = vpack.c.b16 %v1066, %v1065
    %v1159 = vpack.c.b16 %v1068, %v1067
    %v1160 = vpack.c.b16 %v1070, %v1069
    %v1161 = vpack.c.b16 %v1072, %v1071
    %v1162 = vpack.c.b16 %v1074, %v1073
    %v1163 = vpack.c.b16 %v1076, %v1075
    %v1164 = vpack.c.b16 %v1078, %v1077
    %v1165 = vpack.c.b16 %v1080, %v1079
    %v1166 = vpack.c.b16 %v1082, %v1081
    %v1167 = vpack.c.b16 %v1084, %v1083
    %v1168 = vpack.c.b16 %v1086, %v1085
    %v1169 = vpack.c.b16 %v1088, %v1087
    %v1170 = vpack.c.b16 %v1090, %v1089
    %v1171 = vpack.c.b16 %v1092, %v1091
    %v1172 = vpack.c.b16 %v1094, %v1093
    %v1173 = vpack.c.b16 %v1096, %v1095
    %v1174 = vpack.c.b16 %v1098, %v1097
    %v1175 = vpack.c.b16 %v1100, %v1099
    %v1176 = vpack.c.b16 %v1102, %v1101
    %v1177 = vpack.c.b16 %v1104, %v1103
    %v1178 = vpack.c.b16 %v1106, %v1105
    %v1179 = vpack.c.b16 %v1108, %v1107
    %v1180 = vpack.c.b16 %v1110, %v1109
    %v1181 = vpack.c.b16 %v1112, %v1111
    %v1182 = vpack.c.b16 %v1114, %v1113
    %v1183 = vpack.c.b16 %v1116, %v1115
    %v1184 = vpack.c.b16 %v1118, %v1117
    %v1185 = vpack.c.b16 %v1120, %v1119
    %v1186 = vpack.c.b16 %v1122, %v1121
    %1251 = vmatprep.subr.bf16.mxu0 0
    %1252 = vmatpush1.bf16.msra.mxu0 %v1123
    %1253 = vmatprep.subr.bf16.mxu0 0
    %1254 = vmatpush1.bf16.msra.mxu0 %v1124
    %1255 = vmatprep.subr.bf16.mxu0 0
    %1256 = vmatpush1.bf16.msra.mxu0 %v1125
    %1257 = vmatprep.subr.bf16.mxu0 0
    %1258 = vmatpush1.bf16.msra.mxu0 %v1126
    %1259 = vmatprep.subr.bf16.mxu0 0
    %1260 = vmatpush1.bf16.msra.mxu0 %v1127
    %1261 = vmatprep.subr.bf16.mxu0 0
    %1262 = vmatpush1.bf16.msra.mxu0 %v1128
    %1263 = vmatprep.subr.bf16.mxu0 0
    %1264 = vmatpush1.bf16.msra.mxu0 %v1129
    %1265 = vmatprep.subr.bf16.mxu0 0
    %1266 = vmatpush1.bf16.msra.mxu0 %v1130
    %1267 = vmatprep.subr.bf16.mxu0 0
    %1268 = vmatpush1.bf16.msra.mxu0 %v1131
    %1269 = vmatprep.subr.bf16.mxu0 0
    %1270 = vmatpush1.bf16.msra.mxu0 %v1132
    %1271 = vmatprep.subr.bf16.mxu0 0
    %1272 = vmatpush1.bf16.msra.mxu0 %v1133
    %1273 = vmatprep.subr.bf16.mxu0 0
    %1274 = vmatpush1.bf16.msra.mxu0 %v1134
    %1275 = vmatprep.subr.bf16.mxu0 0
    %1276 = vmatpush1.bf16.msra.mxu0 %v1135
    %1277 = vmatprep.subr.bf16.mxu0 0
    %1278 = vmatpush1.bf16.msra.mxu0 %v1136
    %1279 = vmatprep.subr.bf16.mxu0 0
    %1280 = vmatpush1.bf16.msra.mxu0 %v1137
    %1281 = vmatprep.subr.bf16.mxu0 0
    %1282 = vmatpush1.bf16.msra.mxu0 %v1138
    %1283 = vmatprep.mubr.bf16.mxu0 %v854
    %1284 = vmatmul.mubr.bf16.gmra.mrb[0].mxu0 %v853
    %v1285 = vpop.f32.mrb[0].mxu0
    %v1286 = vadd.f32 %v865, %v1285
    %v1287 = vpop.f32.mrb[0].mxu0
    %v1288 = vpop.f32.mrb[0].mxu0
    %v1289 = vpop.f32.mrb[0].mxu0
    %1290 = vdwg.mxu0
    %1291 = vmatprep.subr.bf16.mxu0 0
    %1292 = vmatpush1.bf16.msra.mxu0 %v1139
    %1293 = vmatprep.subr.bf16.mxu0 0
    %1294 = vmatpush1.bf16.msra.mxu0 %v1140
    %1295 = vmatprep.subr.bf16.mxu0 0
    %1296 = vmatpush1.bf16.msra.mxu0 %v1141
    %1297 = vmatprep.subr.bf16.mxu0 0
    %1298 = vmatpush1.bf16.msra.mxu0 %v1142
    %1299 = vmatprep.subr.bf16.mxu0 0
    %1300 = vmatpush1.bf16.msra.mxu0 %v1143
    %1301 = vmatprep.subr.bf16.mxu0 0
    %1302 = vmatpush1.bf16.msra.mxu0 %v1144
    %1303 = vmatprep.subr.bf16.mxu0 0
    %1304 = vmatpush1.bf16.msra.mxu0 %v1145
    %1305 = vmatprep.subr.bf16.mxu0 0
    %1306 = vmatpush1.bf16.msra.mxu0 %v1146
    %1307 = vmatprep.subr.bf16.mxu0 0
    %1308 = vmatpush1.bf16.msra.mxu0 %v1147
    %1309 = vmatprep.subr.bf16.mxu0 0
    %1310 = vmatpush1.bf16.msra.mxu0 %v1148
    %1311 = vmatprep.subr.bf16.mxu0 0
    %1312 = vmatpush1.bf16.msra.mxu0 %v1149
    %1313 = vmatprep.subr.bf16.mxu0 0
    %1314 = vmatpush1.bf16.msra.mxu0 %v1150
    %1315 = vmatprep.subr.bf16.mxu0 0
    %1316 = vmatpush1.bf16.msra.mxu0 %v1151
    %1317 = vmatprep.subr.bf16.mxu0 0
    %1318 = vmatpush1.bf16.msra.mxu0 %v1152
    %1319 = vmatprep.subr.bf16.mxu0 0
    %1320 = vmatpush1.bf16.msra.mxu0 %v1153
    %1321 = vmatprep.subr.bf16.mxu0 0
    %1322 = vmatpush1.bf16.msra.mxu0 %v1154
    %1323 = vmatprep.mubr.bf16.mxu0 %v856
    %1324 = vmatmul.mubr.bf16.gmra.mrb[0].mxu0 %v855
    %v1325 = vpop.f32.mrb[0].mxu0
    %v1326 = vadd.f32 %v1286, %v1325
    %v1327 = vpop.f32.mrb[0].mxu0
    %v1328 = vpop.f32.mrb[0].mxu0
    %v1329 = vpop.f32.mrb[0].mxu0
    %1330 = vdwg.mxu0
    %1331 = vmatprep.subr.bf16.mxu0 0
    %1332 = vmatpush1.bf16.msra.mxu0 %v1155
    %1333 = vmatprep.subr.bf16.mxu0 0
    %1334 = vmatpush1.bf16.msra.mxu0 %v1156
    %1335 = vmatprep.subr.bf16.mxu0 0
    %1336 = vmatpush1.bf16.msra.mxu0 %v1157
    %1337 = vmatprep.subr.bf16.mxu0 0
    %1338 = vmatpush1.bf16.msra.mxu0 %v1158
    %1339 = vmatprep.subr.bf16.mxu0 0
    %1340 = vmatpush1.bf16.msra.mxu0 %v1159
    %1341 = vmatprep.subr.bf16.mxu0 0
    %1342 = vmatpush1.bf16.msra.mxu0 %v1160
    %1343 = vmatprep.subr.bf16.mxu0 0
    %1344 = vmatpush1.bf16.msra.mxu0 %v1161
    %1345 = vmatprep.subr.bf16.mxu0 0
    %1346 = vmatpush1.bf16.msra.mxu0 %v1162
    %1347 = vmatprep.subr.bf16.mxu0 0
    %1348 = vmatpush1.bf16.msra.mxu0 %v1163
    %1349 = vmatprep.subr.bf16.mxu0 0
    %1350 = vmatpush1.bf16.msra.mxu0 %v1164
    %1351 = vmatprep.subr.bf16.mxu0 0
    %1352 = vmatpush1.bf16.msra.mxu0 %v1165
    %1353 = vmatprep.subr.bf16.mxu0 0
    %1354 = vmatpush1.bf16.msra.mxu0 %v1166
    %1355 = vmatprep.subr.bf16.mxu0 0
    %1356 = vmatpush1.bf16.msra.mxu0 %v1167
    %1357 = vmatprep.subr.bf16.mxu0 0
    %1358 = vmatpush1.bf16.msra.mxu0 %v1168
    %1359 = vmatprep.subr.bf16.mxu0 0
    %1360 = vmatpush1.bf16.msra.mxu0 %v1169
    %1361 = vmatprep.subr.bf16.mxu0 0
    %1362 = vmatpush1.bf16.msra.mxu0 %v1170
    %1363 = vmatprep.mubr.bf16.mxu0 %v858
    %1364 = vmatmul.mubr.bf16.gmra.mrb[0].mxu0 %v857
    %v1365 = vpop.f32.mrb[0].mxu0
    %v1366 = vadd.f32 %v1326, %v1365
    %v1367 = vpop.f32.mrb[0].mxu0
    %v1368 = vpop.f32.mrb[0].mxu0
    %v1369 = vpop.f32.mrb[0].mxu0
    %1370 = vdwg.mxu0
    %1371 = vmatprep.subr.bf16.mxu0 0
    %1372 = vmatpush1.bf16.msra.mxu0 %v1171
    %1373 = vmatprep.subr.bf16.mxu0 0
    %1374 = vmatpush1.bf16.msra.mxu0 %v1172
    %1375 = vmatprep.subr.bf16.mxu0 0
    %1376 = vmatpush1.bf16.msra.mxu0 %v1173
    %1377 = vmatprep.subr.bf16.mxu0 0
    %1378 = vmatpush1.bf16.msra.mxu0 %v1174
    %1379 = vmatprep.subr.bf16.mxu0 0
    %1380 = vmatpush1.bf16.msra.mxu0 %v1175
    %1381 = vmatprep.subr.bf16.mxu0 0
    %1382 = vmatpush1.bf16.msra.mxu0 %v1176
    %1383 = vmatprep.subr.bf16.mxu0 0
    %1384 = vmatpush1.bf16.msra.mxu0 %v1177
    %1385 = vmatprep.subr.bf16.mxu0 0
    %1386 = vmatpush1.bf16.msra.mxu0 %v1178
    %1387 = vmatprep.subr.bf16.mxu0 0
    %1388 = vmatpush1.bf16.msra.mxu0 %v1179
    %1389 = vmatprep.subr.bf16.mxu0 0
    %1390 = vmatpush1.bf16.msra.mxu0 %v1180
    %1391 = vmatprep.subr.bf16.mxu0 0
    %1392 = vmatpush1.bf16.msra.mxu0 %v1181
    %1393 = vmatprep.subr.bf16.mxu0 0
    %1394 = vmatpush1.bf16.msra.mxu0 %v1182
    %1395 = vmatprep.subr.bf16.mxu0 0
    %1396 = vmatpush1.bf16.msra.mxu0 %v1183
    %1397 = vmatprep.subr.bf16.mxu0 0
    %1398 = vmatpush1.bf16.msra.mxu0 %v1184
    %1399 = vmatprep.subr.bf16.mxu0 0
    %1400 = vmatpush1.bf16.msra.mxu0 %v1185
    %1401 = vmatprep.subr.bf16.mxu0 0
    %1402 = vmatpush1.bf16.msra.mxu0 %v1186
    %1403 = vmatprep.mubr.bf16.mxu0 %v860
    %1404 = vmatmul.mubr.bf16.gmra.mrb[0].mxu0 %v859
    %v1405 = vpop.f32.mrb[0].mxu0
    %v1406 = vadd.f32 %v1366, %v1405
    %v1407 = vpop.f32.mrb[0].mxu0
    %v1408 = vpop.f32.mrb[0].mxu0
    %v1409 = vpop.f32.mrb[0].mxu0
    %1410 = vdwg.mxu0
    %1411 = vst [vmem:[#allocation14] sm:$0xff] %v1406
    %v1412 = vld [vmem:[#allocation11] sm:$0xff]
    %v1413 = vld [vmem:[#allocation11 + $0x8] sm:$0xff]
    %v1414 = vld [vmem:[#allocation11 + $0x10] sm:$0xff]
    %v1415 = vld [vmem:[#allocation11 + $0x18] sm:$0xff]
    %v1416 = vld [vmem:[%s7] sm:$0x3]
    %v1417 = vld [vmem:[#allocation12] sm:$0xf]
    %v1418 = vld [vmem:[#allocation12 + $0x4] sm:$0xf]
    %v1419 = vld [vmem:[#allocation12 + $0x8] sm:$0xf]
    %v1420 = vld [vmem:[#allocation12 + $0xc] sm:$0xf]
    %v1421 = vld [vmem:[#allocation12 + $0x10] sm:$0xf]
    %v1422 = vld [vmem:[#allocation12 + $0x14] sm:$0xf]
    %v1423 = vld [vmem:[#allocation12 + $0x18] sm:$0xf]
    %v1424 = vld [vmem:[#allocation12 + $0x1c] sm:$0xf]
    %v1425 = vld [vmem:[#allocation12 + $0x20] sm:$0xf]
    %v1426 = vld [vmem:[#allocation12 + $0x24] sm:$0xf]
    %v1427 = vld [vmem:[#allocation12 + $0x28] sm:$0xf]
    %v1428 = vld [vmem:[#allocation12 + $0x2c] sm:$0xf]
    %v1429 = vld [vmem:[#allocation12 + $0x30] sm:$0xf]
    %v1430 = vld [vmem:[#allocation12 + $0x34] sm:$0xf]
    %v1431 = vld [vmem:[#allocation12 + $0x38] sm:$0xf]
    %v1432 = vld [vmem:[#allocation12 + $0x3c] sm:$0xf]
    %v1433 = vld [vmem:[#allocation12 + $0x40] sm:$0xf]
    %v1434 = vld [vmem:[#allocation12 + $0x44] sm:$0xf]
    %v1435 = vld [vmem:[#allocation12 + $0x48] sm:$0xf]
    %v1436 = vld [vmem:[#allocation12 + $0x4c] sm:$0xf]
    %v1437 = vld [vmem:[#allocation12 + $0x50] sm:$0xf]
    %v1438 = vld [vmem:[#allocation12 + $0x54] sm:$0xf]
    %v1439 = vld [vmem:[#allocation12 + $0x58] sm:$0xf]
    %v1440 = vld [vmem:[#allocation12 + $0x5c] sm:$0xf]
    %v1441 = vld [vmem:[#allocation12 + $0x60] sm:$0xf]
    %v1442 = vld [vmem:[#allocation12 + $0x64] sm:$0xf]
    %v1443 = vld [vmem:[#allocation12 + $0x68] sm:$0xf]
    %v1444 = vld [vmem:[#allocation12 + $0x6c] sm:$0xf]
    %v1445 = vld [vmem:[#allocation12 + $0x70] sm:$0xf]
    %v1446 = vld [vmem:[#allocation12 + $0x74] sm:$0xf]
    %v1447 = vld [vmem:[#allocation12 + $0x78] sm:$0xf]
    %v1448 = vld [vmem:[#allocation12 + $0x7c] sm:$0xf]
    %v1449 = vld [vmem:[%s9] sm:$0x1]
    %v1451 = vlaneseq
    %v1452 = vshrl.u32 %v1451, 7
    %v1453 = vsub.s32 0, %v1452
    %v1454 = vrot.slane %v1416, %v1453
    %v1455 = vlaneseq
    %v1456 = vshrl.u32 %v1455, 7
    %v1457 = vsub.s32 1, %v1456
    %v1458 = vrot.slane %v1416, %v1457
    %v1465 = vunpack.c.l.b16 %v1412
    %v1466 = vunpack.c.h.b16 %v1412
    %v1467 = vunpack.c.l.b16 %v1413
    %v1468 = vunpack.c.h.b16 %v1413
    %v1469 = vunpack.c.l.b16 %v1414
    %v1470 = vunpack.c.h.b16 %v1414
    %v1471 = vunpack.c.l.b16 %v1415
    %v1472 = vunpack.c.h.b16 %v1415
    %v1473 = vpack.c.b16 %v1467, %v1465
    %v1474 = vpack.c.b16 %v1468, %v1466
    %v1475 = vpack.c.b16 %v1471, %v1469
    %v1476 = vpack.c.b16 %v1472, %v1470
    %v1482 = vsel %vm677, %v409, 0
    %1484 = vmatprep.subr.bf16.mxu0 %v1474
    %1485 = vmatpush1.bf16.msra.mxu0 %v1473
    %1486 = vmatprep.subr.bf16.mxu0 %v1476
    %1487 = vmatpush1.bf16.msra.mxu0 %v1475
    %1488 = vmatprep.subr.bf16.mxu0 0
    %1489 = vmatpush1.bf16.msra.mxu0 0
    %1490 = vmatprep.subr.bf16.mxu0 0
    %1491 = vmatpush1.bf16.msra.mxu0 0
    %1492 = vmatprep.subr.bf16.mxu0 0
    %1493 = vmatpush1.bf16.msra.mxu0 0
    %1494 = vmatprep.subr.bf16.mxu0 0
    %1495 = vmatpush1.bf16.msra.mxu0 0
    %1496 = vmatprep.subr.bf16.mxu0 0
    %1497 = vmatpush1.bf16.msra.mxu0 0
    %1498 = vmatprep.subr.bf16.mxu0 0
    %1499 = vmatpush1.bf16.msra.mxu0 0
    %1500 = vmatprep.subr.bf16.mxu0 0
    %1501 = vmatpush1.bf16.msra.mxu0 0
    %1502 = vmatprep.subr.bf16.mxu0 0
    %1503 = vmatpush1.bf16.msra.mxu0 0
    %1504 = vmatprep.subr.bf16.mxu0 0
    %1505 = vmatpush1.bf16.msra.mxu0 0
    %1506 = vmatprep.subr.bf16.mxu0 0
    %1507 = vmatpush1.bf16.msra.mxu0 0
    %1508 = vmatprep.subr.bf16.mxu0 0
    %1509 = vmatpush1.bf16.msra.mxu0 0
    %1510 = vmatprep.subr.bf16.mxu0 0
    %1511 = vmatpush1.bf16.msra.mxu0 0
    %1512 = vmatprep.subr.bf16.mxu0 0
    %1513 = vmatpush1.bf16.msra.mxu0 0
    %1514 = vmatprep.subr.bf16.mxu0 0
    %1515 = vmatpush1.bf16.msra.mxu0 0
    %1516 = vmatprep.mubr.bf16.mxu0 0
    %1517 = vmatmul.mubr.bf16.gmra.mrb[0].mxu0 %v1482
    %v1518 = vpop.f32.mrb[0].mxu0
    %v1519 = vadd.f32 %v1454, %v1518
    %v1520 = vpop.f32.mrb[0].mxu0
    %v1521 = vadd.f32 %v1458, %v1520
    %v1522 = vpop.f32.mrb[0].mxu0
    %v1523 = vpop.f32.mrb[0].mxu0
    %1524 = vdwg.mxu0
    %v1525 = vmax.f32 %v1519, 0.0
    %v1526 = vmax.f32 %v1521, 0.0
    %v1527 = vpack.c.bf16 %v1525, %v1525
    %v1528 = vpack.c.bf16 %v1526, %v1526
    %v1530 = vlaneseq
    %v1531 = vshrl.u32 %v1530, 7
    %v1532 = vsub.s32 0, %v1531
    %v1533 = vrot.slane %v1449, %v1532
    %v1567 = vunpack.c.l.b16 %v1417
    %v1568 = vunpack.c.l.b16 %v1418
    %v1569 = vunpack.c.l.b16 %v1419
    %v1570 = vunpack.c.l.b16 %v1420
    %v1571 = vunpack.c.l.b16 %v1421
    %v1572 = vunpack.c.l.b16 %v1422
    %v1573 = vunpack.c.l.b16 %v1423
    %v1574 = vunpack.c.l.b16 %v1424
    %v1575 = vunpack.c.l.b16 %v1425
    %v1576 = vunpack.c.l.b16 %v1426
    %v1577 = vunpack.c.l.b16 %v1427
    %v1578 = vunpack.c.l.b16 %v1428
    %v1579 = vunpack.c.l.b16 %v1429
    %v1580 = vunpack.c.l.b16 %v1430
    %v1581 = vunpack.c.l.b16 %v1431
    %v1582 = vunpack.c.l.b16 %v1432
    %v1583 = vunpack.c.l.b16 %v1433
    %v1584 = vunpack.c.l.b16 %v1434
    %v1585 = vunpack.c.l.b16 %v1435
    %v1586 = vunpack.c.l.b16 %v1436
    %v1587 = vunpack.c.l.b16 %v1437
    %v1588 = vunpack.c.l.b16 %v1438
    %v1589 = vunpack.c.l.b16 %v1439
    %v1590 = vunpack.c.l.b16 %v1440
    %v1591 = vunpack.c.l.b16 %v1441
    %v1592 = vunpack.c.l.b16 %v1442
    %v1593 = vunpack.c.l.b16 %v1443
    %v1594 = vunpack.c.l.b16 %v1444
    %v1595 = vunpack.c.l.b16 %v1445
    %v1596 = vunpack.c.l.b16 %v1446
    %v1597 = vunpack.c.l.b16 %v1447
    %v1598 = vunpack.c.l.b16 %v1448
    %v1599 = vpack.c.b16 %v1568, %v1567
    %v1600 = vpack.c.b16 %v1570, %v1569
    %v1601 = vpack.c.b16 %v1572, %v1571
    %v1602 = vpack.c.b16 %v1574, %v1573
    %v1603 = vpack.c.b16 %v1576, %v1575
    %v1604 = vpack.c.b16 %v1578, %v1577
    %v1605 = vpack.c.b16 %v1580, %v1579
    %v1606 = vpack.c.b16 %v1582, %v1581
    %v1607 = vpack.c.b16 %v1584, %v1583
    %v1608 = vpack.c.b16 %v1586, %v1585
    %v1609 = vpack.c.b16 %v1588, %v1587
    %v1610 = vpack.c.b16 %v1590, %v1589
    %v1611 = vpack.c.b16 %v1592, %v1591
    %v1612 = vpack.c.b16 %v1594, %v1593
    %v1613 = vpack.c.b16 %v1596, %v1595
    %v1614 = vpack.c.b16 %v1598, %v1597
    %1631 = vmatprep.subr.bf16.mxu0 0
    %1632 = vmatpush1.bf16.msra.mxu0 %v1599
    %1633 = vmatprep.subr.bf16.mxu0 0
    %1634 = vmatpush1.bf16.msra.mxu0 %v1600
    %1635 = vmatprep.subr.bf16.mxu0 0
    %1636 = vmatpush1.bf16.msra.mxu0 %v1601
    %1637 = vmatprep.subr.bf16.mxu0 0
    %1638 = vmatpush1.bf16.msra.mxu0 %v1602
    %1639 = vmatprep.subr.bf16.mxu0 0
    %1640 = vmatpush1.bf16.msra.mxu0 %v1603
    %1641 = vmatprep.subr.bf16.mxu0 0
    %1642 = vmatpush1.bf16.msra.mxu0 %v1604
    %1643 = vmatprep.subr.bf16.mxu0 0
    %1644 = vmatpush1.bf16.msra.mxu0 %v1605
    %1645 = vmatprep.subr.bf16.mxu0 0
    %1646 = vmatpush1.bf16.msra.mxu0 %v1606
    %1647 = vmatprep.subr.bf16.mxu0 0
    %1648 = vmatpush1.bf16.msra.mxu0 %v1607
    %1649 = vmatprep.subr.bf16.mxu0 0
    %1650 = vmatpush1.bf16.msra.mxu0 %v1608
    %1651 = vmatprep.subr.bf16.mxu0 0
    %1652 = vmatpush1.bf16.msra.mxu0 %v1609
    %1653 = vmatprep.subr.bf16.mxu0 0
    %1654 = vmatpush1.bf16.msra.mxu0 %v1610
    %1655 = vmatprep.subr.bf16.mxu0 0
    %1656 = vmatpush1.bf16.msra.mxu0 %v1611
    %1657 = vmatprep.subr.bf16.mxu0 0
    %1658 = vmatpush1.bf16.msra.mxu0 %v1612
    %1659 = vmatprep.subr.bf16.mxu0 0
    %1660 = vmatpush1.bf16.msra.mxu0 %v1613
    %1661 = vmatprep.subr.bf16.mxu0 0
    %1662 = vmatpush1.bf16.msra.mxu0 %v1614
    %1663 = vmatprep.mubr.bf16.mxu0 %v1528
    %1664 = vmatmul.mubr.bf16.gmra.mrb[0].mxu0 %v1527
    %v1665 = vpop.f32.mrb[0].mxu0
    %v1666 = vadd.f32 %v1533, %v1665
    %v1667 = vpop.f32.mrb[0].mxu0
    %v1668 = vpop.f32.mrb[0].mxu0
    %v1669 = vpop.f32.mrb[0].mxu0
    %1670 = vdwg.mxu0
    %1671 = vst [vmem:[#allocation15] sm:$0xff] %v1666
    // Predicated region
    $region114: #{tpu_custom_call.1} parent=1 // pred_check
      _
    $region115: #{tpu_custom_call.1} parent=1 // pred_check_branch
      %1673 = sbr.rel (0) target = $region117
    $region116: #{tpu_custom_call.1} parent=1 // pred_region
      %s1675 = ssub.s32 128, 128
      %1676 = vsyncadd [#allocation8], %s1675
      %s1678 = sshll.u32 [#allocation14], 4
      %s1679 = int_to_ptr.vmem [resolvable:$true] %s1678
      %1681 = dma.vmem_to_hbm [thread:$0]  %s1679, 128, %s10, [#allocation8]
    $region117: #{tpu_custom_call.1} parent=1 // pred_fallthru
      _
    // Predicated region
    $region118: #{tpu_custom_call.1} parent=1 // pred_check
      _
    $region119: #{tpu_custom_call.1} parent=1 // pred_check_branch
      %1683 = sbr.rel (0) target = $region121
    $region120: #{tpu_custom_call.1} parent=1 // pred_region
      %s1685 = ssub.s32 128, 128
      %1686 = vsyncadd [#allocation16], %s1685
      %s1688 = sshll.u32 [#allocation15], 4
      %s1689 = int_to_ptr.vmem [resolvable:$true] %s1688
      %1691 = dma.vmem_to_hbm [thread:$0]  %s1689, 128, %s11, [#allocation16]
    $region121: #{tpu_custom_call.1} parent=1 // pred_fallthru
      _
    // Predicated region
    $region122: #{tpu_custom_call.1} parent=1 // pred_check
      _
    $region123: #{tpu_custom_call.1} parent=1 // pred_check_branch
      %1693 = sbr.rel (0) target = $region125
    $region124: #{tpu_custom_call.1} parent=1 // pred_region
      %1694 = dma.done [#allocation8], 128
    $region125: #{tpu_custom_call.1} parent=1 // pred_fallthru
      _
    // Predicated region
    $region126: #{tpu_custom_call.1} parent=1 // pred_check
      _
    $region127: #{tpu_custom_call.1} parent=1 // pred_check_branch
      %1696 = sbr.rel (0) target = $region129
    $region128: #{tpu_custom_call.1} parent=1 // pred_region
      %1697 = dma.done [#allocation16], 128
    $region129: #{tpu_custom_call.1} parent=1 // pred_fallthru
      _
    %1698 = vsyncpa [#allocation7], 1
    %1699 = vsyncpa [#allocation10], 1
    %1700 = vsyncpa [#allocation13], 1
    %1701 = vsyncpa [#allocation8], 1
    %1702 = vsyncpa [#allocation16], 1
  %1703 = vsyncmov [#allocation3]
  %s1704 = vpop.sfrf %1703
  %p1705 = scmp.eq.s32.totalorder %s1704, 0
  %p1706 = pneg %p1705
  %1708 = shalt.err (%p1706)
  %s1709 = scalar_lea.sflag [#allocation3], 1
  %1710 = vsyncmov %s1709
  %s1711 = vpop.sfrf %1710
  %p1712 = scmp.eq.s32.totalorder %s1711, 0
  %p1713 = pneg %p1712
  %1715 = shalt.err (%p1713)
  %s1716 = scalar_lea.sflag [#allocation3], 2
  %1717 = vsyncmov %s1716
  %s1718 = vpop.sfrf %1717
  %p1719 = scmp.eq.s32.totalorder %s1718, 0
  %p1720 = pneg %p1719
  %1722 = shalt.err (%p1720)
  %s1723 = scalar_lea.sflag [#allocation3], 3
  %1724 = vsyncmov %s1723
  %s1725 = vpop.sfrf %1724
  %p1726 = scmp.eq.s32.totalorder %s1725, 0
  %p1727 = pneg %p1726
  %1729 = shalt.err (%p1727)
  %s1730 = scalar_lea.sflag [#allocation3], 4
  %1731 = vsyncmov %s1730
  %s1732 = vpop.sfrf %1731
  %p1733 = scmp.eq.s32.totalorder %s1732, 0
  %p1734 = pneg %p1733
  %1736 = shalt.err (%p1734)
  %s1737 = scalar_lea.sflag [#allocation3], 5
  %1738 = vsyncmov %s1737
  %s1739 = vpop.sfrf %1738
  %p1740 = scmp.eq.s32.totalorder %s1739, 0
  %p1741 = pneg %p1740
  %1743 = shalt.err (%p1741)
  %s1744 = scalar_lea.sflag [#allocation3], 6
  %1745 = vsyncmov %s1744
  %s1746 = vpop.sfrf %1745
  %p1747 = scmp.eq.s32.totalorder %s1746, 0
  %p1748 = pneg %p1747
  %1750 = shalt.err (%p1748)
  %s1751 = scalar_lea.sflag [#allocation3], 7
  %1752 = vsyncmov %s1751
  %s1753 = vpop.sfrf %1752
  %p1754 = scmp.eq.s32.totalorder %s1753, 0
  %p1755 = pneg %p1754
  %1757 = shalt.err (%p1755)
  %s1758 = scalar_lea.sflag [#allocation3], 8
  %1759 = vsyncmov %s1758
  %s1760 = vpop.sfrf %1759
  %p1761 = scmp.eq.s32.totalorder %s1760, 0
  %p1762 = pneg %p1761
  %1764 = shalt.err (%p1762)
  %s1765 = scalar_lea.sflag [#allocation3], 9
  %1766 = vsyncmov %s1765
  %s1767 = vpop.sfrf %1766
  %p1768 = scmp.eq.s32.totalorder %s1767, 0
  %p1769 = pneg %p1768
  %1771 = shalt.err (%p1769)
  %s1772 = scalar_lea.sflag [#allocation3], 10
  %1773 = vsyncmov %s1772
  %s1774 = vpop.sfrf %1773
  %p1775 = scmp.eq.s32.totalorder %s1774, 0
  %p1776 = pneg %p1775
  %1778 = shalt.err (%p1776)
  %s1779 = scalar_lea.sflag [#allocation3], 11
  %1780 = vsyncmov %s1779
  %s1781 = vpop.sfrf %1780
  %p1782 = scmp.eq.s32.totalorder %s1781, 0
  %p1783 = pneg %p1782
  %1785 = shalt.err (%p1783)
  %s1786 = scalar_lea.sflag [#allocation3], 12
  %1787 = vsyncmov %s1786
  %s1788 = vpop.sfrf %1787
  %p1789 = scmp.eq.s32.totalorder %s1788, 0
  %p1790 = pneg %p1789
  %1792 = shalt.err (%p1790)
  %s1793 = scalar_lea.sflag [#allocation3], 13
  %1794 = vsyncmov %s1793
  %s1795 = vpop.sfrf %1794
  %p1796 = scmp.eq.s32.totalorder %s1795, 0
  %p1797 = pneg %p1796
  %1799 = shalt.err (%p1797)
  %s1800 = scalar_lea.sflag [#allocation3], 14
  %1801 = vsyncmov %s1800
  %s1802 = vpop.sfrf %1801
  %p1803 = scmp.eq.s32.totalorder %s1802, 0
  %p1804 = pneg %p1803
  %1806 = shalt.err (%p1804)
  %s1807 = scalar_lea.sflag [#allocation3], 15
  %1808 = vsyncmov %s1807
  %s1809 = vpop.sfrf %1808
  %p1810 = scmp.eq.s32.totalorder %s1809, 0
  %p1811 = pneg %p1810
  %1813 = shalt.err (%p1811)

</llo_original>
